<compile_context>
chip_gen: v7x
topology: tpu7x:2x2x1
jax: 0.10.0
libtpu: 0.0.40
codegen_flags: <defaults>
</compile_context>

<pallas_src>
import functools
import math

import jax
import jax.numpy as jnp
from jax.experimental import pallas as pl
from jax.experimental.pallas import tpu as pltpu

KSIZE = 5          # tp = 'dwconv5'
PAD = (KSIZE - 1) // 2
_INV_SQRT2 = 0.7071067811865476


def _erf_gelu(x):
    """Exact-GELU 0.5*x*(1+erf(x/sqrt(2))) with an in-kernel erf.

    erf uses the Abramowitz-Stegun 7.1.26 polynomial (|abs err| <= 1.5e-7, far below the
    fp32 noise of the conv itself), so the kernel does not depend on a Mosaic lowering for
    lax.erf and the exp() lands on the EUP slot (review item 5: keep the VALU for taps).
    """
    z = x * _INV_SQRT2
    a = jnp.abs(z)
    t = 1.0 / (1.0 + 0.3275911 * a)
    poly = t * (0.254829592 + t * (-0.284496736 + t * (1.421413741
                + t * (-1.453152027 + t * 1.061405429))))
    erf_a = 1.0 - poly * jnp.exp(-(a * a))
    erf_z = jnp.where(z < 0.0, -erf_a, erf_a)
    return 0.5 * x * (1.0 + erf_z)


def _dwconv_kernel(x_ref, w_ref, b_ref, o_ref, xs_ref, *, BT, H, W, C):
    # x_ref:  (BT, H, W*C)      input block (lane-dense fused W*C axis)
    # w_ref:  (25, W*C)         column-masked, W-tiled depthwise weights
    # b_ref:  (1, W*C)          W-tiled bias
    # o_ref:  (BT, H, W*C)      output block
    # xs_ref: (5, H+4, W*C)     scratch: the 5 lane-rolled, H-padded copies of one image
    WC = W * C

    # Halo rows of the rolled-copy scratch are zero for every image and never overwritten
    # below, so zero them once per grid step.  (Deliberately NOT gated on program_id == 0:
    # under "parallel" semantics each TensorCore owns its own scratch instance.)
    halo = jnp.zeros((KSIZE, PAD, WC), jnp.float32)
    xs_ref[:, :PAD, :] = halo
    xs_ref[:, PAD + H:, :] = halo

    bias = b_ref[0]          # (W*C,) hoisted; weights stay in VMEM and load per tap below

    def image(bt, carry):
        # ---- stage 1: 4 lane rolls (XLU), materialized once per image -----------------
        # One rolled copy per column offset dw (dw == PAD needs no roll).  The wrapped
        # lanes are zeroed by the column mask baked into the fused weights.
        xg = x_ref[bt].astype(jnp.float32)                       # (H, W*C)
        for dw in range(KSIZE):
            sw = ((PAD - dw) * C) % WC
            xs_ref[dw, PAD:PAD + H, :] = pltpu.roll(xg, sw, axis=1) if sw else xg

        # ---- stage 2: 25 taps = pure VMEM load + FMA on the VALU -----------------------
        # Row offset dh handled by the load address; per-tap weight row loaded at its
        # point of use (review item 3) so only the accumulator stays register resident.
        acc = jnp.broadcast_to(bias, (H, WC))
        for dh in range(KSIZE):
            for dw in range(KSIZE):
                acc = acc + xs_ref[dw, dh:dh + H, :] * w_ref[dh * KSIZE + dw]

        o_ref[bt] = _erf_gelu(acc).astype(o_ref.dtype)
        return carry

    if BT == 1:
        image(0, 0)
    else:
        jax.lax.fori_loop(0, BT, image, 0)


def _fuse_weights(weight, bias, W, C):
    """weight (5,5,C), bias (C,) -> (25, W*C) column-masked weights and (1, W*C) bias."""
    dw = jnp.arange(KSIZE)
    wcol = jnp.arange(W)
    src = wcol[None, :] + dw[:, None] - PAD                      # (5, W) source column
    valid = (src >= 0) & (src < W)                               # (5, W)
    wfull = jnp.broadcast_to(weight[:, :, None, :], (KSIZE, KSIZE, W, C))
    wfused = jnp.where(valid[None, :, :, None], wfull, 0.0)
    wfused = wfused.reshape(KSIZE * KSIZE, W * C).astype(jnp.float32)
    bfused = jnp.tile(bias.astype(jnp.float32), (W,)).reshape(1, W * C)
    return wfused, bfused


def _vmem_capacity_bytes():
    try:
        cap = getattr(pltpu.get_tpu_info(), "vmem_capacity_bytes", None)
        if cap:
            return int(cap)
    except Exception:
        pass
    return 64 << 20   # conservative fallback: v7x has the smallest per-core VMEM


def _pick_batch_tile(B, img_bytes):
    # ~2 MiB input blocks (amortize the ~0.35 us/step pipeline overhead on v5e/v6e), but
    # keep >= 4 grid steps when the batch allows so each of v7x's two TensorCores gets at
    # least 2 steps and can double-buffer its block DMAs.
    bt = max(1, min(B, (2 << 20) // max(img_bytes, 1)))
    if B >= 4:
        bt = min(bt, B // 4)
    elif B >= 2:
        bt = min(bt, B // 2)
    while B % bt:
        bt -= 1
    return bt


def dwconv_pallas(x, x_size, weight, bias):
    """x: (B, L, C) float32; x_size=(H, W); weight: (5,5,C); bias: (C,). Returns (B, L, C)."""
    H, W = x_size
    B, L, C = x.shape
    assert L == H * W, "token count L must equal H*W"
    WC = W * C
    assert WC % 128 == 0, (
        f"fused lane axis W*C={WC} must be a multiple of 128 for the lane-dense layout")
    # TODO(synk): when W*C % 128 != 0, pad C (or choose a different fusion) instead of asserting.
    Hp = H + 2 * PAD

    # Free reshape: (b, h*W+w, c) -> (b, h, w*C+c); no data movement, lane-dense last axis.
    x_fused = x.reshape(B, H, WC)
    wfused, bfused = _fuse_weights(weight, bias, W, C)

    img_bytes = 4 * H * WC
    BT = _pick_batch_tile(B, img_bytes)
    grid = (B // BT,)

    # VMEM budget: double-buffered in+out blocks + rolled-copy scratch + params (+ headroom),
    # capped well below the physical capacity reported by the hardware (64 MiB on v7x).
    bytes_per_block = 4 * BT * H * WC
    est = (2 * 2 * bytes_per_block
           + 4 * KSIZE * Hp * WC
           + 2 * 4 * (KSIZE * KSIZE + 1) * WC)
    vmem_cap = _vmem_capacity_bytes()
    vmem_limit = int(min(max(2 * est + (4 << 20), 16 << 20), vmem_cap * 3 // 5))
    # TODO(synk): single images larger than this VMEM budget (possible on v7x's 64 MiB)
    # additionally need row-strip tiling with a PAD-row halo; not required at these sizes.

    kernel = functools.partial(_dwconv_kernel, BT=BT, H=H, W=W, C=C)

    out_fused = pl.pallas_call(
        kernel,
        out_shape=jax.ShapeDtypeStruct((B, H, WC), x.dtype),
        grid_spec=pltpu.PrefetchScalarGridSpec(
            num_scalar_prefetch=0,
            grid=grid,
            in_specs=[
                pl.BlockSpec((BT, H, WC), lambda i: (i, 0, 0)),
                pl.BlockSpec((KSIZE * KSIZE, WC), lambda i: (0, 0)),   # grid-invariant
                pl.BlockSpec((1, WC), lambda i: (0, 0)),               # grid-invariant
            ],
            out_specs=pl.BlockSpec((BT, H, WC), lambda i: (i, 0, 0)),
            scratch_shapes=[pltpu.VMEM((KSIZE, Hp, WC), jnp.float32)],
        ),
        compiler_params=pltpu.CompilerParams(
            dimension_semantics=("parallel",),
            vmem_limit_bytes=vmem_limit),
    )(x_fused, wfused, bfused)

    return out_fused.reshape(B, L, C)


def _reference(x, x_size, weight, bias):
    # Pure-JAX reference: depthwise conv via conv_general_dilated + exact (erf) GELU.
    H, W = x_size
    B, L, C = x.shape
    x_nhwc = x.reshape(B, H, W, C)
    k = weight.reshape(KSIZE, KSIZE, 1, C)                       # HWIO, groups=C
    y = jax.lax.conv_general_dilated(
        x_nhwc, k, window_strides=(1, 1), padding=((PAD, PAD), (PAD, PAD)),
        dimension_numbers=("NHWC", "HWIO", "NHWC"), feature_group_count=C)
    y = y + bias
    y = 0.5 * y * (1.0 + jax.lax.erf(y * _INV_SQRT2))
    return y.reshape(B, L, C)


if __name__ == "__main__":
    key = jax.random.PRNGKey(0)

    def run_case(B, H, W, C, case_key):
        L = H * W
        k_x, k_w, k_b = jax.random.split(case_key, 3)
        x = jax.random.normal(k_x, (B, L, C), dtype=jnp.float32)
        # Deterministic init mirroring nn.Conv2d defaults (depthwise: fan_in = 1*5*5).
        bound = 1.0 / math.sqrt(KSIZE * KSIZE)
        weight = jax.random.uniform(k_w, (KSIZE, KSIZE, C), jnp.float32,
                                    minval=-bound, maxval=bound)
        bias = jax.random.uniform(k_b, (C,), jnp.float32, minval=-bound, maxval=bound)

        out = jax.block_until_ready(dwconv_pallas(x, (H, W), weight, bias))
        ref = _reference(x, (H, W), weight, bias)
        assert out.shape == (B, L, C)
        err = float(jnp.max(jnp.abs(out - ref)))
        assert err < 1e-4, \
            f"mismatch vs reference (B={B}, H={H}, W={W}, C={C}): max|err|={err}"

    k1, k2, k3 = jax.random.split(key, 3)
    run_case(2, 16, 16, 32, k1)    # BT=1, grid=(2,)  -- direct (no fori_loop) path
    run_case(8, 8, 8, 64, k2)      # BT=2, grid=(4,)  -- fori_loop over 2 images per step
    run_case(16, 16, 16, 32, k3)   # BT=4, grid=(4,)  -- fori_loop over 4 images per step
    print("KERNEL_OK")
</pallas_src>

<mosaic_0001>
module attributes {stable_mosaic.version = 11 : i64} {
  func.func @_dwconv_kernel(%arg0: i32, %arg1: memref<1x16x512xf32, #tpu.memory_space<vmem>>, %arg2: memref<25x512xf32, #tpu.memory_space<vmem>>, %arg3: memref<1x512xf32, #tpu.memory_space<vmem>>, %arg4: memref<1x16x512xf32, #tpu.memory_space<vmem>>, %arg5: memref<5x20x512xf32, #tpu.memory_space<vmem>>) attributes {dimension_semantics = [#tpu.dimension_semantics<parallel>], iteration_bounds = array<i64: 2>, scalar_prefetch = 0 : i64, scratch_operands = 1 : i64, tpu.core_type = #tpu.core_type<tc>, window_params = [{transform_indices = @transform_0, window_bounds = array<i64: 1, 16, 512>}, {pipeline_mode = #tpu.pipeline_mode<synchronous>, transform_indices = @transform_1, window_bounds = array<i64: 25, 512>}, {pipeline_mode = #tpu.pipeline_mode<synchronous>, transform_indices = @transform_2, window_bounds = array<i64: 1, 512>}, {transform_indices = @transform_3, window_bounds = array<i64: 1, 16, 512>}]} {
    %cst = arith.constant 0.000000e+00 : f32
    %0 = vector.broadcast %cst : f32 to vector<5x2x512xf32>
    %c0 = arith.constant 0 : index
    %c0_0 = arith.constant 0 : index
    %c0_1 = arith.constant 0 : index
    %1 = vector.load %arg5[%c0, %c0_0, %c0_1] : memref<5x20x512xf32, #tpu.memory_space<vmem>>, vector<5x2x512xf32>
    tpu.vector_store %arg5[%c0, %c0_0, %c0_1], %0 {strides = array<i32>} : memref<5x20x512xf32, #tpu.memory_space<vmem>>, vector<5x2x512xf32>,
    %c0_2 = arith.constant 0 : index
    %c18 = arith.constant 18 : index
    %c0_3 = arith.constant 0 : index
    %2 = vector.load %arg5[%c0_2, %c18, %c0_3] : memref<5x20x512xf32, #tpu.memory_space<vmem>>, vector<5x2x512xf32>
    tpu.vector_store %arg5[%c0_2, %c18, %c0_3], %0 {strides = array<i32>} : memref<5x20x512xf32, #tpu.memory_space<vmem>>, vector<5x2x512xf32>,
    %c0_4 = arith.constant 0 : index
    %c0_5 = arith.constant 0 : index
    %3 = vector.load %arg3[%c0_4, %c0_5] : memref<1x512xf32, #tpu.memory_space<vmem>>, vector<1x512xf32>
    %4 = vector.shape_cast %3 : vector<1x512xf32> to vector<512xf32>
    %c0_6 = arith.constant 0 : index
    %c0_7 = arith.constant 0 : index
    %c0_8 = arith.constant 0 : index
    %5 = vector.load %arg1[%c0_6, %c0_7, %c0_8] : memref<1x16x512xf32, #tpu.memory_space<vmem>>, vector<1x16x512xf32>
    %6 = vector.shape_cast %5 : vector<1x16x512xf32> to vector<16x512xf32>
    %c64_i32 = arith.constant 64 : i32
    %7 = tpu.dynamic_rotate %6 by %c64_i32 dim 1 : vector<16x512xf32>, i32 -> vector<16x512xf32>
    %c0_9 = arith.constant 0 : index
    %c2 = arith.constant 2 : index
    %c0_10 = arith.constant 0 : index
    %8 = vector.load %arg5[%c0_9, %c2, %c0_10] : memref<5x20x512xf32, #tpu.memory_space<vmem>>, vector<1x16x512xf32>
    %9 = vector.shape_cast %8 : vector<1x16x512xf32> to vector<16x512xf32>
    %10 = vector.shape_cast %7 : vector<16x512xf32> to vector<1x16x512xf32>
    tpu.vector_store %arg5[%c0_9, %c2, %c0_10], %10 {strides = array<i32>} : memref<5x20x512xf32, #tpu.memory_space<vmem>>, vector<1x16x512xf32>,
    %c32_i32 = arith.constant 32 : i32
    %11 = tpu.dynamic_rotate %6 by %c32_i32 dim 1 : vector<16x512xf32>, i32 -> vector<16x512xf32>
    %c1 = arith.constant 1 : index
    %c2_11 = arith.constant 2 : index
    %c0_12 = arith.constant 0 : index
    %12 = vector.load %arg5[%c1, %c2_11, %c0_12] : memref<5x20x512xf32, #tpu.memory_space<vmem>>, vector<1x16x512xf32>
    %13 = vector.shape_cast %12 : vector<1x16x512xf32> to vector<16x512xf32>
    %14 = vector.shape_cast %11 : vector<16x512xf32> to vector<1x16x512xf32>
    tpu.vector_store %arg5[%c1, %c2_11, %c0_12], %14 {strides = array<i32>} : memref<5x20x512xf32, #tpu.memory_space<vmem>>, vector<1x16x512xf32>,
    %c2_13 = arith.constant 2 : index
    %c2_14 = arith.constant 2 : index
    %c0_15 = arith.constant 0 : index
    %15 = vector.load %arg5[%c2_13, %c2_14, %c0_15] : memref<5x20x512xf32, #tpu.memory_space<vmem>>, vector<1x16x512xf32>
    %16 = vector.shape_cast %15 : vector<1x16x512xf32> to vector<16x512xf32>
    %17 = vector.shape_cast %6 : vector<16x512xf32> to vector<1x16x512xf32>
    tpu.vector_store %arg5[%c2_13, %c2_14, %c0_15], %17 {strides = array<i32>} : memref<5x20x512xf32, #tpu.memory_space<vmem>>, vector<1x16x512xf32>,
    %c480_i32 = arith.constant 480 : i32
    %18 = tpu.dynamic_rotate %6 by %c480_i32 dim 1 : vector<16x512xf32>, i32 -> vector<16x512xf32>
    %c3 = arith.constant 3 : index
    %c2_16 = arith.constant 2 : index
    %c0_17 = arith.constant 0 : index
    %19 = vector.load %arg5[%c3, %c2_16, %c0_17] : memref<5x20x512xf32, #tpu.memory_space<vmem>>, vector<1x16x512xf32>
    %20 = vector.shape_cast %19 : vector<1x16x512xf32> to vector<16x512xf32>
    %21 = vector.shape_cast %18 : vector<16x512xf32> to vector<1x16x512xf32>
    tpu.vector_store %arg5[%c3, %c2_16, %c0_17], %21 {strides = array<i32>} : memref<5x20x512xf32, #tpu.memory_space<vmem>>, vector<1x16x512xf32>,
    %c448_i32 = arith.constant 448 : i32
    %22 = tpu.dynamic_rotate %6 by %c448_i32 dim 1 : vector<16x512xf32>, i32 -> vector<16x512xf32>
    %c4 = arith.constant 4 : index
    %c2_18 = arith.constant 2 : index
    %c0_19 = arith.constant 0 : index
    %23 = vector.load %arg5[%c4, %c2_18, %c0_19] : memref<5x20x512xf32, #tpu.memory_space<vmem>>, vector<1x16x512xf32>
    %24 = vector.shape_cast %23 : vector<1x16x512xf32> to vector<16x512xf32>
    %25 = vector.shape_cast %22 : vector<16x512xf32> to vector<1x16x512xf32>
    tpu.vector_store %arg5[%c4, %c2_18, %c0_19], %25 {strides = array<i32>} : memref<5x20x512xf32, #tpu.memory_space<vmem>>, vector<1x16x512xf32>,
    %26 = vector.shape_cast %4 : vector<512xf32> to vector<1x512xf32>
    %27 = vector.broadcast %26 : vector<1x512xf32> to vector<16x512xf32>
    %c0_20 = arith.constant 0 : index
    %c0_21 = arith.constant 0 : index
    %c0_22 = arith.constant 0 : index
    %28 = vector.load %arg5[%c0_20, %c0_21, %c0_22] : memref<5x20x512xf32, #tpu.memory_space<vmem>>, vector<1x16x512xf32>
    %29 = vector.shape_cast %28 : vector<1x16x512xf32> to vector<16x512xf32>
    %c0_23 = arith.constant 0 : index
    %c0_24 = arith.constant 0 : index
    %30 = vector.load %arg2[%c0_23, %c0_24] : memref<25x512xf32, #tpu.memory_space<vmem>>, vector<1x512xf32>
    %31 = vector.shape_cast %30 : vector<1x512xf32> to vector<512xf32>
    %32 = vector.shape_cast %31 : vector<512xf32> to vector<1x512xf32>
    %33 = vector.broadcast %32 : vector<1x512xf32> to vector<16x512xf32>
    %34 = arith.mulf %29, %33 : vector<16x512xf32>
    %35 = arith.addf %27, %34 : vector<16x512xf32>
    %c1_25 = arith.constant 1 : index
    %c0_26 = arith.constant 0 : index
    %c0_27 = arith.constant 0 : index
    %36 = vector.load %arg5[%c1_25, %c0_26, %c0_27] : memref<5x20x512xf32, #tpu.memory_space<vmem>>, vector<1x16x512xf32>
    %37 = vector.shape_cast %36 : vector<1x16x512xf32> to vector<16x512xf32>
    %c1_28 = arith.constant 1 : index
    %c0_29 = arith.constant 0 : index
    %38 = vector.load %arg2[%c1_28, %c0_29] : memref<25x512xf32, #tpu.memory_space<vmem>>, vector<1x512xf32>
    %39 = vector.shape_cast %38 : vector<1x512xf32> to vector<512xf32>
    %40 = vector.shape_cast %39 : vector<512xf32> to vector<1x512xf32>
    %41 = vector.broadcast %40 : vector<1x512xf32> to vector<16x512xf32>
    %42 = arith.mulf %37, %41 : vector<16x512xf32>
    %43 = arith.addf %35, %42 : vector<16x512xf32>
    %c2_30 = arith.constant 2 : index
    %c0_31 = arith.constant 0 : index
    %c0_32 = arith.constant 0 : index
    %44 = vector.load %arg5[%c2_30, %c0_31, %c0_32] : memref<5x20x512xf32, #tpu.memory_space<vmem>>, vector<1x16x512xf32>
    %45 = vector.shape_cast %44 : vector<1x16x512xf32> to vector<16x512xf32>
    %c2_33 = arith.constant 2 : index
    %c0_34 = arith.constant 0 : index
    %46 = vector.load %arg2[%c2_33, %c0_34] : memref<25x512xf32, #tpu.memory_space<vmem>>, vector<1x512xf32>
    %47 = vector.shape_cast %46 : vector<1x512xf32> to vector<512xf32>
    %48 = vector.shape_cast %47 : vector<512xf32> to vector<1x512xf32>
    %49 = vector.broadcast %48 : vector<1x512xf32> to vector<16x512xf32>
    %50 = arith.mulf %45, %49 : vector<16x512xf32>
    %51 = arith.addf %43, %50 : vector<16x512xf32>
    %c3_35 = arith.constant 3 : index
    %c0_36 = arith.constant 0 : index
    %c0_37 = arith.constant 0 : index
    %52 = vector.load %arg5[%c3_35, %c0_36, %c0_37] : memref<5x20x512xf32, #tpu.memory_space<vmem>>, vector<1x16x512xf32>
    %53 = vector.shape_cast %52 : vector<1x16x512xf32> to vector<16x512xf32>
    %c3_38 = arith.constant 3 : index
    %c0_39 = arith.constant 0 : index
    %54 = vector.load %arg2[%c3_38, %c0_39] : memref<25x512xf32, #tpu.memory_space<vmem>>, vector<1x512xf32>
    %55 = vector.shape_cast %54 : vector<1x512xf32> to vector<512xf32>
    %56 = vector.shape_cast %55 : vector<512xf32> to vector<1x512xf32>
    %57 = vector.broadcast %56 : vector<1x512xf32> to vector<16x512xf32>
    %58 = arith.mulf %53, %57 : vector<16x512xf32>
    %59 = arith.addf %51, %58 : vector<16x512xf32>
    %c4_40 = arith.constant 4 : index
    %c0_41 = arith.constant 0 : index
    %c0_42 = arith.constant 0 : index
    %60 = vector.load %arg5[%c4_40, %c0_41, %c0_42] : memref<5x20x512xf32, #tpu.memory_space<vmem>>, vector<1x16x512xf32>
    %61 = vector.shape_cast %60 : vector<1x16x512xf32> to vector<16x512xf32>
    %c4_43 = arith.constant 4 : index
    %c0_44 = arith.constant 0 : index
    %62 = vector.load %arg2[%c4_43, %c0_44] : memref<25x512xf32, #tpu.memory_space<vmem>>, vector<1x512xf32>
    %63 = vector.shape_cast %62 : vector<1x512xf32> to vector<512xf32>
    %64 = vector.shape_cast %63 : vector<512xf32> to vector<1x512xf32>
    %65 = vector.broadcast %64 : vector<1x512xf32> to vector<16x512xf32>
    %66 = arith.mulf %61, %65 : vector<16x512xf32>
    %67 = arith.addf %59, %66 : vector<16x512xf32>
    %c0_45 = arith.constant 0 : index
    %c1_46 = arith.constant 1 : index
    %c0_47 = arith.constant 0 : index
    %68 = vector.load %arg5[%c0_45, %c1_46, %c0_47] : memref<5x20x512xf32, #tpu.memory_space<vmem>>, vector<1x16x512xf32>
    %69 = vector.shape_cast %68 : vector<1x16x512xf32> to vector<16x512xf32>
    %c5 = arith.constant 5 : index
    %c0_48 = arith.constant 0 : index
    %70 = vector.load %arg2[%c5, %c0_48] : memref<25x512xf32, #tpu.memory_space<vmem>>, vector<1x512xf32>
    %71 = vector.shape_cast %70 : vector<1x512xf32> to vector<512xf32>
    %72 = vector.shape_cast %71 : vector<512xf32> to vector<1x512xf32>
    %73 = vector.broadcast %72 : vector<1x512xf32> to vector<16x512xf32>
    %74 = arith.mulf %69, %73 : vector<16x512xf32>
    %75 = arith.addf %67, %74 : vector<16x512xf32>
    %c1_49 = arith.constant 1 : index
    %c1_50 = arith.constant 1 : index
    %c0_51 = arith.constant 0 : index
    %76 = vector.load %arg5[%c1_49, %c1_50, %c0_51] : memref<5x20x512xf32, #tpu.memory_space<vmem>>, vector<1x16x512xf32>
    %77 = vector.shape_cast %76 : vector<1x16x512xf32> to vector<16x512xf32>
    %c6 = arith.constant 6 : index
    %c0_52 = arith.constant 0 : index
    %78 = vector.load %arg2[%c6, %c0_52] : memref<25x512xf32, #tpu.memory_space<vmem>>, vector<1x512xf32>
    %79 = vector.shape_cast %78 : vector<1x512xf32> to vector<512xf32>
    %80 = vector.shape_cast %79 : vector<512xf32> to vector<1x512xf32>
    %81 = vector.broadcast %80 : vector<1x512xf32> to vector<16x512xf32>
    %82 = arith.mulf %77, %81 : vector<16x512xf32>
    %83 = arith.addf %75, %82 : vector<16x512xf32>
    %c2_53 = arith.constant 2 : index
    %c1_54 = arith.constant 1 : index
    %c0_55 = arith.constant 0 : index
    %84 = vector.load %arg5[%c2_53, %c1_54, %c0_55] : memref<5x20x512xf32, #tpu.memory_space<vmem>>, vector<1x16x512xf32>
    %85 = vector.shape_cast %84 : vector<1x16x512xf32> to vector<16x512xf32>
    %c7 = arith.constant 7 : index
    %c0_56 = arith.constant 0 : index
    %86 = vector.load %arg2[%c7, %c0_56] : memref<25x512xf32, #tpu.memory_space<vmem>>, vector<1x512xf32>
    %87 = vector.shape_cast %86 : vector<1x512xf32> to vector<512xf32>
    %88 = vector.shape_cast %87 : vector<512xf32> to vector<1x512xf32>
    %89 = vector.broadcast %88 : vector<1x512xf32> to vector<16x512xf32>
    %90 = arith.mulf %85, %89 : vector<16x512xf32>
    %91 = arith.addf %83, %90 : vector<16x512xf32>
    %c3_57 = arith.constant 3 : index
    %c1_58 = arith.constant 1 : index
    %c0_59 = arith.constant 0 : index
    %92 = vector.load %arg5[%c3_57, %c1_58, %c0_59] : memref<5x20x512xf32, #tpu.memory_space<vmem>>, vector<1x16x512xf32>
    %93 = vector.shape_cast %92 : vector<1x16x512xf32> to vector<16x512xf32>
    %c8 = arith.constant 8 : index
    %c0_60 = arith.constant 0 : index
    %94 = vector.load %arg2[%c8, %c0_60] : memref<25x512xf32, #tpu.memory_space<vmem>>, vector<1x512xf32>
    %95 = vector.shape_cast %94 : vector<1x512xf32> to vector<512xf32>
    %96 = vector.shape_cast %95 : vector<512xf32> to vector<1x512xf32>
    %97 = vector.broadcast %96 : vector<1x512xf32> to vector<16x512xf32>
    %98 = arith.mulf %93, %97 : vector<16x512xf32>
    %99 = arith.addf %91, %98 : vector<16x512xf32>
    %c4_61 = arith.constant 4 : index
    %c1_62 = arith.constant 1 : index
    %c0_63 = arith.constant 0 : index
    %100 = vector.load %arg5[%c4_61, %c1_62, %c0_63] : memref<5x20x512xf32, #tpu.memory_space<vmem>>, vector<1x16x512xf32>
    %101 = vector.shape_cast %100 : vector<1x16x512xf32> to vector<16x512xf32>
    %c9 = arith.constant 9 : index
    %c0_64 = arith.constant 0 : index
    %102 = vector.load %arg2[%c9, %c0_64] : memref<25x512xf32, #tpu.memory_space<vmem>>, vector<1x512xf32>
    %103 = vector.shape_cast %102 : vector<1x512xf32> to vector<512xf32>
    %104 = vector.shape_cast %103 : vector<512xf32> to vector<1x512xf32>
    %105 = vector.broadcast %104 : vector<1x512xf32> to vector<16x512xf32>
    %106 = arith.mulf %101, %105 : vector<16x512xf32>
    %107 = arith.addf %99, %106 : vector<16x512xf32>
    %c0_65 = arith.constant 0 : index
    %c2_66 = arith.constant 2 : index
    %c0_67 = arith.constant 0 : index
    %108 = vector.load %arg5[%c0_65, %c2_66, %c0_67] : memref<5x20x512xf32, #tpu.memory_space<vmem>>, vector<1x16x512xf32>
    %109 = vector.shape_cast %108 : vector<1x16x512xf32> to vector<16x512xf32>
    %c10 = arith.constant 10 : index
    %c0_68 = arith.constant 0 : index
    %110 = vector.load %arg2[%c10, %c0_68] : memref<25x512xf32, #tpu.memory_space<vmem>>, vector<1x512xf32>
    %111 = vector.shape_cast %110 : vector<1x512xf32> to vector<512xf32>
    %112 = vector.shape_cast %111 : vector<512xf32> to vector<1x512xf32>
    %113 = vector.broadcast %112 : vector<1x512xf32> to vector<16x512xf32>
    %114 = arith.mulf %109, %113 : vector<16x512xf32>
    %115 = arith.addf %107, %114 : vector<16x512xf32>
    %c1_69 = arith.constant 1 : index
    %c2_70 = arith.constant 2 : index
    %c0_71 = arith.constant 0 : index
    %116 = vector.load %arg5[%c1_69, %c2_70, %c0_71] : memref<5x20x512xf32, #tpu.memory_space<vmem>>, vector<1x16x512xf32>
    %117 = vector.shape_cast %116 : vector<1x16x512xf32> to vector<16x512xf32>
    %c11 = arith.constant 11 : index
    %c0_72 = arith.constant 0 : index
    %118 = vector.load %arg2[%c11, %c0_72] : memref<25x512xf32, #tpu.memory_space<vmem>>, vector<1x512xf32>
    %119 = vector.shape_cast %118 : vector<1x512xf32> to vector<512xf32>
    %120 = vector.shape_cast %119 : vector<512xf32> to vector<1x512xf32>
    %121 = vector.broadcast %120 : vector<1x512xf32> to vector<16x512xf32>
    %122 = arith.mulf %117, %121 : vector<16x512xf32>
    %123 = arith.addf %115, %122 : vector<16x512xf32>
    %c2_73 = arith.constant 2 : index
    %c2_74 = arith.constant 2 : index
    %c0_75 = arith.constant 0 : index
    %124 = vector.load %arg5[%c2_73, %c2_74, %c0_75] : memref<5x20x512xf32, #tpu.memory_space<vmem>>, vector<1x16x512xf32>
    %125 = vector.shape_cast %124 : vector<1x16x512xf32> to vector<16x512xf32>
    %c12 = arith.constant 12 : index
    %c0_76 = arith.constant 0 : index
    %126 = vector.load %arg2[%c12, %c0_76] : memref<25x512xf32, #tpu.memory_space<vmem>>, vector<1x512xf32>
    %127 = vector.shape_cast %126 : vector<1x512xf32> to vector<512xf32>
    %128 = vector.shape_cast %127 : vector<512xf32> to vector<1x512xf32>
    %129 = vector.broadcast %128 : vector<1x512xf32> to vector<16x512xf32>
    %130 = arith.mulf %125, %129 : vector<16x512xf32>
    %131 = arith.addf %123, %130 : vector<16x512xf32>
    %c3_77 = arith.constant 3 : index
    %c2_78 = arith.constant 2 : index
    %c0_79 = arith.constant 0 : index
    %132 = vector.load %arg5[%c3_77, %c2_78, %c0_79] : memref<5x20x512xf32, #tpu.memory_space<vmem>>, vector<1x16x512xf32>
    %133 = vector.shape_cast %132 : vector<1x16x512xf32> to vector<16x512xf32>
    %c13 = arith.constant 13 : index
    %c0_80 = arith.constant 0 : index
    %134 = vector.load %arg2[%c13, %c0_80] : memref<25x512xf32, #tpu.memory_space<vmem>>, vector<1x512xf32>
    %135 = vector.shape_cast %134 : vector<1x512xf32> to vector<512xf32>
    %136 = vector.shape_cast %135 : vector<512xf32> to vector<1x512xf32>
    %137 = vector.broadcast %136 : vector<1x512xf32> to vector<16x512xf32>
    %138 = arith.mulf %133, %137 : vector<16x512xf32>
    %139 = arith.addf %131, %138 : vector<16x512xf32>
    %c4_81 = arith.constant 4 : index
    %c2_82 = arith.constant 2 : index
    %c0_83 = arith.constant 0 : index
    %140 = vector.load %arg5[%c4_81, %c2_82, %c0_83] : memref<5x20x512xf32, #tpu.memory_space<vmem>>, vector<1x16x512xf32>
    %141 = vector.shape_cast %140 : vector<1x16x512xf32> to vector<16x512xf32>
    %c14 = arith.constant 14 : index
    %c0_84 = arith.constant 0 : index
    %142 = vector.load %arg2[%c14, %c0_84] : memref<25x512xf32, #tpu.memory_space<vmem>>, vector<1x512xf32>
    %143 = vector.shape_cast %142 : vector<1x512xf32> to vector<512xf32>
    %144 = vector.shape_cast %143 : vector<512xf32> to vector<1x512xf32>
    %145 = vector.broadcast %144 : vector<1x512xf32> to vector<16x512xf32>
    %146 = arith.mulf %141, %145 : vector<16x512xf32>
    %147 = arith.addf %139, %146 : vector<16x512xf32>
    %c0_85 = arith.constant 0 : index
    %c3_86 = arith.constant 3 : index
    %c0_87 = arith.constant 0 : index
    %148 = vector.load %arg5[%c0_85, %c3_86, %c0_87] : memref<5x20x512xf32, #tpu.memory_space<vmem>>, vector<1x16x512xf32>
    %149 = vector.shape_cast %148 : vector<1x16x512xf32> to vector<16x512xf32>
    %c15 = arith.constant 15 : index
    %c0_88 = arith.constant 0 : index
    %150 = vector.load %arg2[%c15, %c0_88] : memref<25x512xf32, #tpu.memory_space<vmem>>, vector<1x512xf32>
    %151 = vector.shape_cast %150 : vector<1x512xf32> to vector<512xf32>
    %152 = vector.shape_cast %151 : vector<512xf32> to vector<1x512xf32>
    %153 = vector.broadcast %152 : vector<1x512xf32> to vector<16x512xf32>
    %154 = arith.mulf %149, %153 : vector<16x512xf32>
    %155 = arith.addf %147, %154 : vector<16x512xf32>
    %c1_89 = arith.constant 1 : index
    %c3_90 = arith.constant 3 : index
    %c0_91 = arith.constant 0 : index
    %156 = vector.load %arg5[%c1_89, %c3_90, %c0_91] : memref<5x20x512xf32, #tpu.memory_space<vmem>>, vector<1x16x512xf32>
    %157 = vector.shape_cast %156 : vector<1x16x512xf32> to vector<16x512xf32>
    %c16 = arith.constant 16 : index
    %c0_92 = arith.constant 0 : index
    %158 = vector.load %arg2[%c16, %c0_92] : memref<25x512xf32, #tpu.memory_space<vmem>>, vector<1x512xf32>
    %159 = vector.shape_cast %158 : vector<1x512xf32> to vector<512xf32>
    %160 = vector.shape_cast %159 : vector<512xf32> to vector<1x512xf32>
    %161 = vector.broadcast %160 : vector<1x512xf32> to vector<16x512xf32>
    %162 = arith.mulf %157, %161 : vector<16x512xf32>
    %163 = arith.addf %155, %162 : vector<16x512xf32>
    %c2_93 = arith.constant 2 : index
    %c3_94 = arith.constant 3 : index
    %c0_95 = arith.constant 0 : index
    %164 = vector.load %arg5[%c2_93, %c3_94, %c0_95] : memref<5x20x512xf32, #tpu.memory_space<vmem>>, vector<1x16x512xf32>
    %165 = vector.shape_cast %164 : vector<1x16x512xf32> to vector<16x512xf32>
    %c17 = arith.constant 17 : index
    %c0_96 = arith.constant 0 : index
    %166 = vector.load %arg2[%c17, %c0_96] : memref<25x512xf32, #tpu.memory_space<vmem>>, vector<1x512xf32>
    %167 = vector.shape_cast %166 : vector<1x512xf32> to vector<512xf32>
    %168 = vector.shape_cast %167 : vector<512xf32> to vector<1x512xf32>
    %169 = vector.broadcast %168 : vector<1x512xf32> to vector<16x512xf32>
    %170 = arith.mulf %165, %169 : vector<16x512xf32>
    %171 = arith.addf %163, %170 : vector<16x512xf32>
    %c3_97 = arith.constant 3 : index
    %c3_98 = arith.constant 3 : index
    %c0_99 = arith.constant 0 : index
    %172 = vector.load %arg5[%c3_97, %c3_98, %c0_99] : memref<5x20x512xf32, #tpu.memory_space<vmem>>, vector<1x16x512xf32>
    %173 = vector.shape_cast %172 : vector<1x16x512xf32> to vector<16x512xf32>
    %c18_100 = arith.constant 18 : index
    %c0_101 = arith.constant 0 : index
    %174 = vector.load %arg2[%c18_100, %c0_101] : memref<25x512xf32, #tpu.memory_space<vmem>>, vector<1x512xf32>
    %175 = vector.shape_cast %174 : vector<1x512xf32> to vector<512xf32>
    %176 = vector.shape_cast %175 : vector<512xf32> to vector<1x512xf32>
    %177 = vector.broadcast %176 : vector<1x512xf32> to vector<16x512xf32>
    %178 = arith.mulf %173, %177 : vector<16x512xf32>
    %179 = arith.addf %171, %178 : vector<16x512xf32>
    %c4_102 = arith.constant 4 : index
    %c3_103 = arith.constant 3 : index
    %c0_104 = arith.constant 0 : index
    %180 = vector.load %arg5[%c4_102, %c3_103, %c0_104] : memref<5x20x512xf32, #tpu.memory_space<vmem>>, vector<1x16x512xf32>
    %181 = vector.shape_cast %180 : vector<1x16x512xf32> to vector<16x512xf32>
    %c19 = arith.constant 19 : index
    %c0_105 = arith.constant 0 : index
    %182 = vector.load %arg2[%c19, %c0_105] : memref<25x512xf32, #tpu.memory_space<vmem>>, vector<1x512xf32>
    %183 = vector.shape_cast %182 : vector<1x512xf32> to vector<512xf32>
    %184 = vector.shape_cast %183 : vector<512xf32> to vector<1x512xf32>
    %185 = vector.broadcast %184 : vector<1x512xf32> to vector<16x512xf32>
    %186 = arith.mulf %181, %185 : vector<16x512xf32>
    %187 = arith.addf %179, %186 : vector<16x512xf32>
    %c0_106 = arith.constant 0 : index
    %c4_107 = arith.constant 4 : index
    %c0_108 = arith.constant 0 : index
    %188 = vector.load %arg5[%c0_106, %c4_107, %c0_108] : memref<5x20x512xf32, #tpu.memory_space<vmem>>, vector<1x16x512xf32>
    %189 = vector.shape_cast %188 : vector<1x16x512xf32> to vector<16x512xf32>
    %c20 = arith.constant 20 : index
    %c0_109 = arith.constant 0 : index
    %190 = vector.load %arg2[%c20, %c0_109] : memref<25x512xf32, #tpu.memory_space<vmem>>, vector<1x512xf32>
    %191 = vector.shape_cast %190 : vector<1x512xf32> to vector<512xf32>
    %192 = vector.shape_cast %191 : vector<512xf32> to vector<1x512xf32>
    %193 = vector.broadcast %192 : vector<1x512xf32> to vector<16x512xf32>
    %194 = arith.mulf %189, %193 : vector<16x512xf32>
    %195 = arith.addf %187, %194 : vector<16x512xf32>
    %c1_110 = arith.constant 1 : index
    %c4_111 = arith.constant 4 : index
    %c0_112 = arith.constant 0 : index
    %196 = vector.load %arg5[%c1_110, %c4_111, %c0_112] : memref<5x20x512xf32, #tpu.memory_space<vmem>>, vector<1x16x512xf32>
    %197 = vector.shape_cast %196 : vector<1x16x512xf32> to vector<16x512xf32>
    %c21 = arith.constant 21 : index
    %c0_113 = arith.constant 0 : index
    %198 = vector.load %arg2[%c21, %c0_113] : memref<25x512xf32, #tpu.memory_space<vmem>>, vector<1x512xf32>
    %199 = vector.shape_cast %198 : vector<1x512xf32> to vector<512xf32>
    %200 = vector.shape_cast %199 : vector<512xf32> to vector<1x512xf32>
    %201 = vector.broadcast %200 : vector<1x512xf32> to vector<16x512xf32>
    %202 = arith.mulf %197, %201 : vector<16x512xf32>
    %203 = arith.addf %195, %202 : vector<16x512xf32>
    %c2_114 = arith.constant 2 : index
    %c4_115 = arith.constant 4 : index
    %c0_116 = arith.constant 0 : index
    %204 = vector.load %arg5[%c2_114, %c4_115, %c0_116] : memref<5x20x512xf32, #tpu.memory_space<vmem>>, vector<1x16x512xf32>
    %205 = vector.shape_cast %204 : vector<1x16x512xf32> to vector<16x512xf32>
    %c22 = arith.constant 22 : index
    %c0_117 = arith.constant 0 : index
    %206 = vector.load %arg2[%c22, %c0_117] : memref<25x512xf32, #tpu.memory_space<vmem>>, vector<1x512xf32>
    %207 = vector.shape_cast %206 : vector<1x512xf32> to vector<512xf32>
    %208 = vector.shape_cast %207 : vector<512xf32> to vector<1x512xf32>
    %209 = vector.broadcast %208 : vector<1x512xf32> to vector<16x512xf32>
    %210 = arith.mulf %205, %209 : vector<16x512xf32>
    %211 = arith.addf %203, %210 : vector<16x512xf32>
    %c3_118 = arith.constant 3 : index
    %c4_119 = arith.constant 4 : index
    %c0_120 = arith.constant 0 : index
    %212 = vector.load %arg5[%c3_118, %c4_119, %c0_120] : memref<5x20x512xf32, #tpu.memory_space<vmem>>, vector<1x16x512xf32>
    %213 = vector.shape_cast %212 : vector<1x16x512xf32> to vector<16x512xf32>
    %c23 = arith.constant 23 : index
    %c0_121 = arith.constant 0 : index
    %214 = vector.load %arg2[%c23, %c0_121] : memref<25x512xf32, #tpu.memory_space<vmem>>, vector<1x512xf32>
    %215 = vector.shape_cast %214 : vector<1x512xf32> to vector<512xf32>
    %216 = vector.shape_cast %215 : vector<512xf32> to vector<1x512xf32>
    %217 = vector.broadcast %216 : vector<1x512xf32> to vector<16x512xf32>
    %218 = arith.mulf %213, %217 : vector<16x512xf32>
    %219 = arith.addf %211, %218 : vector<16x512xf32>
    %c4_122 = arith.constant 4 : index
    %c4_123 = arith.constant 4 : index
    %c0_124 = arith.constant 0 : index
    %220 = vector.load %arg5[%c4_122, %c4_123, %c0_124] : memref<5x20x512xf32, #tpu.memory_space<vmem>>, vector<1x16x512xf32>
    %221 = vector.shape_cast %220 : vector<1x16x512xf32> to vector<16x512xf32>
    %c24 = arith.constant 24 : index
    %c0_125 = arith.constant 0 : index
    %222 = vector.load %arg2[%c24, %c0_125] : memref<25x512xf32, #tpu.memory_space<vmem>>, vector<1x512xf32>
    %223 = vector.shape_cast %222 : vector<1x512xf32> to vector<512xf32>
    %224 = vector.shape_cast %223 : vector<512xf32> to vector<1x512xf32>
    %225 = vector.broadcast %224 : vector<1x512xf32> to vector<16x512xf32>
    %226 = arith.mulf %221, %225 : vector<16x512xf32>
    %227 = arith.addf %219, %226 : vector<16x512xf32>
    %cst_126 = arith.constant 0.707106769 : f32
    %228 = vector.broadcast %cst_126 : f32 to vector<16x512xf32>
    %229 = arith.mulf %227, %228 : vector<16x512xf32>
    %230 = math.absf %229 : vector<16x512xf32>
    %cst_127 = arith.constant 0.327591091 : f32
    %231 = vector.broadcast %cst_127 : f32 to vector<16x512xf32>
    %232 = arith.mulf %231, %230 : vector<16x512xf32>
    %cst_128 = arith.constant 1.000000e+00 : f32
    %233 = vector.broadcast %cst_128 : f32 to vector<16x512xf32>
    %234 = arith.addf %233, %232 : vector<16x512xf32>
    %cst_129 = arith.constant 1.000000e+00 : f32
    %235 = vector.broadcast %cst_129 : f32 to vector<16x512xf32>
    %236 = arith.divf %235, %234 : vector<16x512xf32>
    %cst_130 = arith.constant 1.06140542 : f32
    %237 = vector.broadcast %cst_130 : f32 to vector<16x512xf32>
    %238 = arith.mulf %236, %237 : vector<16x512xf32>
    %cst_131 = arith.constant -1.45315206 : f32
    %239 = vector.broadcast %cst_131 : f32 to vector<16x512xf32>
    %240 = arith.addf %239, %238 : vector<16x512xf32>
    %241 = arith.mulf %236, %240 : vector<16x512xf32>
    %cst_132 = arith.constant 1.42141378 : f32
    %242 = vector.broadcast %cst_132 : f32 to vector<16x512xf32>
    %243 = arith.addf %242, %241 : vector<16x512xf32>
    %244 = arith.mulf %236, %243 : vector<16x512xf32>
    %cst_133 = arith.constant -0.284496725 : f32
    %245 = vector.broadcast %cst_133 : f32 to vector<16x512xf32>
    %246 = arith.addf %245, %244 : vector<16x512xf32>
    %247 = arith.mulf %236, %246 : vector<16x512xf32>
    %cst_134 = arith.constant 0.254829586 : f32
    %248 = vector.broadcast %cst_134 : f32 to vector<16x512xf32>
    %249 = arith.addf %248, %247 : vector<16x512xf32>
    %250 = arith.mulf %236, %249 : vector<16x512xf32>
    %251 = arith.mulf %230, %230 : vector<16x512xf32>
    %cst_135 = arith.constant 0.000000e+00 : f32
    %252 = vector.broadcast %cst_135 : f32 to vector<16x512xf32>
    %253 = arith.subf %252, %251 : vector<16x512xf32>
    %254 = math.exp %253 : vector<16x512xf32>
    %255 = arith.mulf %250, %254 : vector<16x512xf32>
    %cst_136 = arith.constant 1.000000e+00 : f32
    %256 = vector.broadcast %cst_136 : f32 to vector<16x512xf32>
    %257 = arith.subf %256, %255 : vector<16x512xf32>
    %cst_137 = arith.constant 0.000000e+00 : f32
    %258 = vector.broadcast %cst_137 : f32 to vector<16x512xf32>
    %259 = arith.cmpf olt, %229, %258 : vector<16x512xf32>
    %cst_138 = arith.constant 0.000000e+00 : f32
    %260 = vector.broadcast %cst_138 : f32 to vector<16x512xf32>
    %261 = arith.subf %260, %257 : vector<16x512xf32>
    %262 = arith.select %259, %261, %257 : vector<16x512xi1>, vector<16x512xf32>
    %cst_139 = arith.constant 5.000000e-01 : f32
    %263 = vector.broadcast %cst_139 : f32 to vector<16x512xf32>
    %264 = arith.mulf %263, %227 : vector<16x512xf32>
    %cst_140 = arith.constant 1.000000e+00 : f32
    %265 = vector.broadcast %cst_140 : f32 to vector<16x512xf32>
    %266 = arith.addf %265, %262 : vector<16x512xf32>
    %267 = arith.mulf %264, %266 : vector<16x512xf32>
    %c0_141 = arith.constant 0 : index
    %c0_142 = arith.constant 0 : index
    %c0_143 = arith.constant 0 : index
    %268 = vector.load %arg4[%c0_141, %c0_142, %c0_143] : memref<1x16x512xf32, #tpu.memory_space<vmem>>, vector<1x16x512xf32>
    %269 = vector.shape_cast %268 : vector<1x16x512xf32> to vector<16x512xf32>
    %270 = vector.shape_cast %267 : vector<16x512xf32> to vector<1x16x512xf32>
    tpu.vector_store %arg4[%c0_141, %c0_142, %c0_143], %270 {strides = array<i32>} : memref<1x16x512xf32, #tpu.memory_space<vmem>>, vector<1x16x512xf32>,
    return
  }
  func.func @transform_0(%arg0: i32) -> (i32, i32, i32) {
    %c0_i32 = arith.constant 0 : i32
    %c0_i32_0 = arith.constant 0 : i32
    %c0_i32_1 = arith.constant 0 : i32
    return %arg0, %c0_i32, %c0_i32_0 : i32, i32, i32
  }
  func.func @transform_1(%arg0: i32) -> (i32, i32) {
    %c0_i32 = arith.constant 0 : i32
    %c0_i32_0 = arith.constant 0 : i32
    %c0_i32_1 = arith.constant 0 : i32
    return %c0_i32, %c0_i32_0 : i32, i32
  }
  func.func @transform_2(%arg0: i32) -> (i32, i32) {
    %c0_i32 = arith.constant 0 : i32
    %c0_i32_0 = arith.constant 0 : i32
    %c0_i32_1 = arith.constant 0 : i32
    return %c0_i32, %c0_i32_0 : i32, i32
  }
  func.func @transform_3(%arg0: i32) -> (i32, i32, i32) {
    %c0_i32 = arith.constant 0 : i32
    %c0_i32_0 = arith.constant 0 : i32
    %c0_i32_1 = arith.constant 0 : i32
    return %arg0, %c0_i32, %c0_i32_0 : i32, i32, i32
  }
}

</mosaic_0001>

<llo_original>
// kernel: tpu_custom_call.1
$region0: #{tpu_custom_call.1}
  #allocation0 [shape = 'u32[]', space=smem, size = 0x4, offset = 0x4, fixed_abs, tag = 'smem constant byte address 0x4 - core index']
  #allocation1 [shape = 'u32[144,128]{1,0:T(1,128)}', space=vmem, size = 0x12000, scoped, tag = 'internal scratch']
  #allocation2 [shape = 'f32[5,20,512]{2,1,0:T(8,128)}', space=vmem, size = 0x3c000, scoped, tag = 'scratch operand']
  %s0 = inlined_call_operand.hbm [shape: f32[2,16,512], index: 0, kind: input, shape index: {}]
  %s1 = inlined_call_operand.hbm [shape: f32[25,512], index: 1, kind: input, shape index: {}]
  %s2 = inlined_call_operand.vmem [shape: f32[1,512], index: 2, kind: input, shape index: {}]
  %s3 = inlined_call_operand.hbm [shape: f32[2,16,512], index: 3, kind: output, shape index: {}]
  %s4 = sld [smem:[#allocation0]]
  $region53: #{tpu_custom_call.1} parent=0
    _
  %s6 = ssub.s32 1, %s4
  %s7 = scalar_select 0, %s6, %s4
  $region1: #{tpu_custom_call.1} parent=0
    #allocation3 [shape = 'u8[65536]{0}', space=vmem, size = 0x10000, scoped, tag = 'input window, operand 0']
    #allocation4 [shape = 's32[2]{0}', space=sflag, size = 0x8, scoped, tag = 'scoped memory for tpu_custom_call.1']
    #allocation5 [shape = 's32[2]{0}', space=sflag, size = 0x8, scoped, tag = 'scoped memory for tpu_custom_call.1']
    #allocation6 [shape = 'u8[65536]{0}', space=vmem, size = 0x10000, scoped, tag = 'input window, operand 1, single buffered']
    #allocation7 [shape = 's32[1]{0}', space=sflag, size = 0x4, scoped, tag = 'scoped memory for tpu_custom_call.1']
    #allocation8 [shape = 'u8[65536]{0}', space=vmem, size = 0x10000, scoped, tag = 'output window, operand 0']
    %8 = vsyncpa [#allocation4], 0
    %s9 = scalar_lea.sflag [#allocation4], 1
    %10 = vsyncpa %s9, 0
    %11 = vsyncpa [#allocation7], 0
    %12 = vsyncpa [#allocation5], 0
    %s13 = scalar_lea.sflag [#allocation5], 1
    %14 = vsyncpa %s13, 0
    loop: start=0, step=1, limit=4
    $region2: #{tpu_custom_call.1} parent=1 // loop_pre_header
      _
    $region3: #{tpu_custom_call.1} parent=1 // loop_header
      %s16 = sphi 0, %s20
      %p17 = scmp.ge.s32.totalorder %s16, 4
      %s26 = sphi 0, %s28
      %s29 = sphi 0, %s26
      %s30 = sphi 0, %s29
      %s46 = sphi 0, %s30
      %s50 = sphi 0, %s50
      %s52 = sphi 0, %s50
      %s53 = sphi 0, %s52
      %s67 = sphi 0, %s53
      %s71 = sphi 0, %s71
      %s73 = sphi 0, %s71
      %s74 = sphi 0, %s73
      %s88 = sphi 0, %s74
      %s94 = sphi 0, %s96
      %s97 = sphi 0, %s94
      %s98 = sphi 0, %s97
      %s114 = sphi 0, %s98
    $region4: #{tpu_custom_call.1} parent=1 // loop_header_branch
      %19 = sbr.rel (%p17) target = $region8
    $region5: #{tpu_custom_call.1} parent=1 // loop_body
      %s21 = ssub.s32 %s16, 1
      %s22 = ssub.s32 %s16, 2
      %s23 = sadd.s32 %s16, 1
      %s24 = ssub.s32 %s16, %s23
      %p25 = scmp.eq.s32.totalorder %s24, 0
      %s27 = sadd.s32 %s26, 1
      %s28 = scalar_select %p25, %s26, %s27
      %p31 = pneg %p25
      %p32 = scmp.eq.s32.totalorder %s16, 1
      %p33 = por %p31, %p32
      %p34 = scmp.ne.s32.totalorder %s26, %s29
      %p35 = scmp.eq.s32.totalorder %s16, 0
      %p36 = por %p34, %p35
      %p37 = scmp.ne.s32.totalorder %s26, %s29
      %p38 = scmp.eq.s32.totalorder %s21, 1
      %p39 = por %p37, %p38
      %p40 = scmp.ne.s32.totalorder %s29, %s30
      %p41 = scmp.eq.s32.totalorder %s21, 0
      %p42 = por %p40, %p41
      %p43 = scmp.ne.s32.totalorder %s29, %s30
      %p44 = scmp.eq.s32.totalorder %s22, 1
      %p45 = por %p43, %p44
      %p47 = scmp.ne.s32.totalorder %s30, %s46
      %p48 = scmp.eq.s32.totalorder %s22, 0
      %p49 = por %p47, %p48
      %s51 = sadd.s32 %s50, 1
      %p54 = scmp.eq.s32.totalorder %s16, 1
      %p55 = scmp.ne.s32.totalorder %s50, %s52
      %p56 = scmp.eq.s32.totalorder %s16, 0
      %p57 = por %p55, %p56
      %p58 = scmp.ne.s32.totalorder %s50, %s52
      %p59 = scmp.eq.s32.totalorder %s21, 1
      %p60 = por %p58, %p59
      %p61 = scmp.ne.s32.totalorder %s52, %s53
      %p62 = scmp.eq.s32.totalorder %s21, 0
      %p63 = por %p61, %p62
      %p64 = scmp.ne.s32.totalorder %s52, %s53
      %p65 = scmp.eq.s32.totalorder %s22, 1
      %p66 = por %p64, %p65
      %p68 = scmp.ne.s32.totalorder %s53, %s67
      %p69 = scmp.eq.s32.totalorder %s22, 0
      %p70 = por %p68, %p69
      %s72 = sadd.s32 %s71, 1
      %p75 = scmp.eq.s32.totalorder %s16, 1
      %p76 = scmp.ne.s32.totalorder %s71, %s73
      %p77 = scmp.eq.s32.totalorder %s16, 0
      %p78 = por %p76, %p77
      %p79 = scmp.ne.s32.totalorder %s71, %s73
      %p80 = scmp.eq.s32.totalorder %s21, 1
      %p81 = por %p79, %p80
      %p82 = scmp.ne.s32.totalorder %s73, %s74
      %p83 = scmp.eq.s32.totalorder %s21, 0
      %p84 = por %p82, %p83
      %p85 = scmp.ne.s32.totalorder %s73, %s74
      %p86 = scmp.eq.s32.totalorder %s22, 1
      %p87 = por %p85, %p86
      %p89 = scmp.ne.s32.totalorder %s74, %s88
      %p90 = scmp.eq.s32.totalorder %s22, 0
      %p91 = por %p89, %p90
      %s92 = ssub.s32 %s16, %s23
      %p93 = scmp.eq.s32.totalorder %s92, 0
      %s95 = sadd.s32 %s94, 1
      %s96 = scalar_select %p93, %s94, %s95
      %p99 = pneg %p93
      %p100 = scmp.eq.s32.totalorder %s16, 1
      %p101 = por %p99, %p100
      %p102 = scmp.ne.s32.totalorder %s94, %s97
      %p103 = scmp.eq.s32.totalorder %s16, 0
      %p104 = por %p102, %p103
      %p105 = scmp.ne.s32.totalorder %s94, %s97
      %p106 = scmp.eq.s32.totalorder %s21, 1
      %p107 = por %p105, %p106
      %p108 = scmp.ne.s32.totalorder %s97, %s98
      %p109 = scmp.eq.s32.totalorder %s21, 0
      %p110 = por %p108, %p109
      %p111 = scmp.ne.s32.totalorder %s97, %s98
      %p112 = scmp.eq.s32.totalorder %s22, 1
      %p113 = por %p111, %p112
      %p115 = scmp.ne.s32.totalorder %s98, %s114
      %p116 = scmp.eq.s32.totalorder %s22, 0
      %p117 = por %p115, %p116
      %p118 = scmp.le.s32.totalorder 1, %s16
      %p119 = scmp.lt.s32.totalorder %s16, 3
      %p120 = pnand %p118, %p119
      %p121 = pneg %p120
      // Predicated region
      $region9: #{tpu_custom_call.1} parent=5 // pred_check
        _
      $region10: #{tpu_custom_call.1} parent=5 // pred_check_branch
        %123 = sbr.rel (%p120) target = $region12
      $region11: #{tpu_custom_call.1} parent=5 // pred_region
        %s124 = ssub.s32 %s16, 1
        // Predicated region
        $region13: #{tpu_custom_call.1} parent=11 // pred_check
          %p125 = pneg %p63
        $region14: #{tpu_custom_call.1} parent=11 // pred_check_branch
          %127 = sbr.rel (%p125) target = $region16
        $region15: #{tpu_custom_call.1} parent=11 // pred_region
          %s129 = ssub.s32 2048, 2048
          %130 = vsyncadd [#allocation7], %s129
          %s131 = sshll.u32 [#allocation6], 4
          %s132 = int_to_ptr.vmem [resolvable:$true] %s131
          %137 = dma.hbm_to_vmem [thread:$0]  %s1, 2048, %s132, [#allocation7], 512, 512, 32
        $region16: #{tpu_custom_call.1} parent=11 // pred_fallthru
          _
        // Predicated region
        $region17: #{tpu_custom_call.1} parent=11 // pred_check
          %p138 = pneg %p84
        $region18: #{tpu_custom_call.1} parent=11 // pred_check_branch
          %140 = sbr.rel (%p138) target = $region20
        $region19: #{tpu_custom_call.1} parent=11 // pred_region
          _
        $region20: #{tpu_custom_call.1} parent=11 // pred_fallthru
          _
      $region12: #{tpu_custom_call.1} parent=5 // pred_fallthru
        _
      %p141 = scmp.lt.s32.totalorder %s16, 2
      // Predicated region
      $region21: #{tpu_custom_call.1} parent=5 // pred_check
        %p142 = pneg %p141
      $region22: #{tpu_custom_call.1} parent=5 // pred_check_branch
        %144 = sbr.rel (%p142) target = $region24
      $region23: #{tpu_custom_call.1} parent=5 // pred_region
        // Predicated region
        $region25: #{tpu_custom_call.1} parent=23 // pred_check
          %p145 = pneg %p36
        $region26: #{tpu_custom_call.1} parent=23 // pred_check_branch
          %147 = sbr.rel (%p145) target = $region28
        $region27: #{tpu_custom_call.1} parent=23 // pred_region
          %s148 = sand.u32 %s26, 1
          %s149 = scalar_lea.sflag [#allocation4], %s148
          %s150 = sand.u32 %s26, 1
          %s151 = smul.addr %s150, 64
          %s152 = scalar_lea.vmem [#allocation3], %s151
          %s154 = ssub.s32 1024, 1024
          %155 = vsyncadd %s149, %s154
          %s156 = smul.addr %s16, 8
          %s157 = smul.addr %s156, 128
          %s158 = scalar_lea.hbm %s0, %s157
          %s159 = sshll.u32 %s152, 4
          %s160 = int_to_ptr.vmem [resolvable:$true] %s159
          %165 = dma.hbm_to_vmem [thread:$0]  %s158, 1024, %s160, %s149, 512, 512, 32
        $region28: #{tpu_custom_call.1} parent=23 // pred_fallthru
          _
      $region24: #{tpu_custom_call.1} parent=5 // pred_fallthru
        _
      %p166 = scmp.le.s32.totalorder 1, %s16
      %p167 = scmp.lt.s32.totalorder %s16, 3
      %p168 = pnand %p166, %p167
      %p169 = pneg %p168
      // Predicated region
      $region29: #{tpu_custom_call.1} parent=5 // pred_check
        _
      $region30: #{tpu_custom_call.1} parent=5 // pred_check_branch
        %171 = sbr.rel (%p168) target = $region32
      $region31: #{tpu_custom_call.1} parent=5 // pred_region
        %s172 = ssub.s32 %s16, 1
        %s173 = sand.u32 %s29, 1
        %s174 = scalar_lea.sflag [#allocation4], %s173
        %s175 = sand.u32 %s29, 1
        %s176 = smul.addr %s175, 64
        %s177 = scalar_lea.vmem [#allocation3], %s176
        // Predicated region
        $region33: #{tpu_custom_call.1} parent=31 // pred_check
          %p178 = pneg %p42
        $region34: #{tpu_custom_call.1} parent=31 // pred_check_branch
          %180 = sbr.rel (%p178) target = $region36
        $region35: #{tpu_custom_call.1} parent=31 // pred_region
          %181 = dma.done %s174, 1024
        $region36: #{tpu_custom_call.1} parent=31 // pred_fallthru
          _
        // Predicated region
        $region37: #{tpu_custom_call.1} parent=31 // pred_check
          %p182 = pneg %p63
        $region38: #{tpu_custom_call.1} parent=31 // pred_check_branch
          %184 = sbr.rel (%p182) target = $region40
        $region39: #{tpu_custom_call.1} parent=31 // pred_region
          %185 = dma.done [#allocation7], 2048
        $region40: #{tpu_custom_call.1} parent=31 // pred_fallthru
          _
        %s186 = sand.u32 %s29, 1
        %s187 = scalar_lea.sflag [#allocation4], %s186
        %s188 = sand.u32 %s29, 1
        %s189 = smul.addr %s188, 64
        %s190 = scalar_lea.vmem [#allocation3], %s189
        %p191 = pneg %p42
        %p192 = pneg %p39
        %p193 = pneg %p63
        %p194 = pneg %p60
        %p195 = pneg %p84
        %p196 = pneg %p81
        %p197 = pneg %p110
        %p198 = pneg %p107
        %s199 = sand.u32 %s97, 1
        %s200 = scalar_lea.sflag [#allocation5], %s199
        %s201 = sand.u32 %s97, 1
        %s202 = smul.addr %s201, 64
        %s203 = scalar_lea.vmem [#allocation8], %s202
        %204 = vst [vmem:[#allocation2] sm:$0x3] 0.0
        %205 = vst [vmem:[#allocation2 + $0x8] sm:$0x3] 0.0
        %206 = vst [vmem:[#allocation2 + $0x10] sm:$0x3] 0.0
        %207 = vst [vmem:[#allocation2 + $0x18] sm:$0x3] 0.0
        %208 = vst [vmem:[#allocation2 + $0x60] sm:$0x3] 0.0
        %209 = vst [vmem:[#allocation2 + $0x68] sm:$0x3] 0.0
        %210 = vst [vmem:[#allocation2 + $0x70] sm:$0x3] 0.0
        %211 = vst [vmem:[#allocation2 + $0x78] sm:$0x3] 0.0
        %212 = vst [vmem:[#allocation2 + $0xc0] sm:$0x3] 0.0
        %213 = vst [vmem:[#allocation2 + $0xc8] sm:$0x3] 0.0
        %214 = vst [vmem:[#allocation2 + $0xd0] sm:$0x3] 0.0
        %215 = vst [vmem:[#allocation2 + $0xd8] sm:$0x3] 0.0
        %216 = vst [vmem:[#allocation2 + $0x120] sm:$0x3] 0.0
        %217 = vst [vmem:[#allocation2 + $0x128] sm:$0x3] 0.0
        %218 = vst [vmem:[#allocation2 + $0x130] sm:$0x3] 0.0
        %219 = vst [vmem:[#allocation2 + $0x138] sm:$0x3] 0.0
        %220 = vst [vmem:[#allocation2 + $0x180] sm:$0x3] 0.0
        %221 = vst [vmem:[#allocation2 + $0x188] sm:$0x3] 0.0
        %222 = vst [vmem:[#allocation2 + $0x190] sm:$0x3] 0.0
        %223 = vst [vmem:[#allocation2 + $0x198] sm:$0x3] 0.0
        %224 = vst [vmem:[#allocation2 + $0x40] sm:$0xc] 0.0
        %225 = vst [vmem:[#allocation2 + $0x48] sm:$0xc] 0.0
        %226 = vst [vmem:[#allocation2 + $0x50] sm:$0xc] 0.0
        %227 = vst [vmem:[#allocation2 + $0x58] sm:$0xc] 0.0
        %228 = vst [vmem:[#allocation2 + $0xa0] sm:$0xc] 0.0
        %229 = vst [vmem:[#allocation2 + $0xa8] sm:$0xc] 0.0
        %230 = vst [vmem:[#allocation2 + $0xb0] sm:$0xc] 0.0
        %231 = vst [vmem:[#allocation2 + $0xb8] sm:$0xc] 0.0
        %232 = vst [vmem:[#allocation2 + $0x100] sm:$0xc] 0.0
        %233 = vst [vmem:[#allocation2 + $0x108] sm:$0xc] 0.0
        %234 = vst [vmem:[#allocation2 + $0x110] sm:$0xc] 0.0
        %235 = vst [vmem:[#allocation2 + $0x118] sm:$0xc] 0.0
        %236 = vst [vmem:[#allocation2 + $0x160] sm:$0xc] 0.0
        %237 = vst [vmem:[#allocation2 + $0x168] sm:$0xc] 0.0
        %238 = vst [vmem:[#allocation2 + $0x170] sm:$0xc] 0.0
        %239 = vst [vmem:[#allocation2 + $0x178] sm:$0xc] 0.0
        %240 = vst [vmem:[#allocation2 + $0x1c0] sm:$0xc] 0.0
        %241 = vst [vmem:[#allocation2 + $0x1c8] sm:$0xc] 0.0
        %242 = vst [vmem:[#allocation2 + $0x1d0] sm:$0xc] 0.0
        %243 = vst [vmem:[#allocation2 + $0x1d8] sm:$0xc] 0.0
        %v244 = vld [vmem:[%s2] sm:$0xf]
        %v245 = vld [vmem:[%s177] sm:$0xff]
        %v246 = vld [vmem:[%s177 + $0x8] sm:$0xff]
        %v247 = vld [vmem:[%s177 + $0x10] sm:$0xff]
        %v248 = vld [vmem:[%s177 + $0x18] sm:$0xff]
        %v249 = vld [vmem:[%s177 + $0x20] sm:$0xff]
        %v250 = vld [vmem:[%s177 + $0x28] sm:$0xff]
        %v251 = vld [vmem:[%s177 + $0x30] sm:$0xff]
        %v252 = vld [vmem:[%s177 + $0x38] sm:$0xff]
        %253 = vrot.lane.b32.xlu0 %v245, 64
        %v254 = vpop.permute.xlu0 %253
        %255 = vrot.lane.b32.xlu0 %v249, 64
        %v256 = vpop.permute.xlu0 %255
        %257 = vrot.lane.b32.xlu0 %v246, 64
        %v258 = vpop.permute.xlu0 %257
        %259 = vrot.lane.b32.xlu0 %v250, 64
        %v260 = vpop.permute.xlu0 %259
        %261 = vrot.lane.b32.xlu0 %v247, 64
        %v262 = vpop.permute.xlu0 %261
        %263 = vrot.lane.b32.xlu0 %v251, 64
        %v264 = vpop.permute.xlu0 %263
        %265 = vrot.lane.b32.xlu0 %v248, 64
        %v266 = vpop.permute.xlu0 %265
        %267 = vrot.lane.b32.xlu0 %v252, 64
        %v268 = vpop.permute.xlu0 %267
        %v269 = vlaneseq
        %v270 = vand.u32 %v269, 127
        %vm271 = vcmp.lt.s32.totalorder %v270, 64
        %v272 = vsel %vm271, %v262, %v266
        %v273 = vsel %vm271, %v264, %v268
        %v274 = vsel %vm271, %v258, %v262
        %v275 = vsel %vm271, %v260, %v264
        %v276 = vsel %vm271, %v254, %v258
        %v277 = vsel %vm271, %v256, %v260
        %v278 = vsel %vm271, %v266, %v254
        %v279 = vsel %vm271, %v268, %v256
        %vm288 = vcmask 1041408
        %v289 = vrot.slane %v278, 6
        %v290 = vrot.slane %v276, 6
        %v291 = vrot.slane %v274, 6
        %v292 = vrot.slane %v272, 6
        %v293 = vrot.slane %v279, 6
        %v294 = vsel %vm288, %v289, %v293
        %v295 = vrot.slane %v277, 6
        %v296 = vsel %vm288, %v290, %v295
        %v297 = vrot.slane %v275, 6
        %v298 = vsel %vm288, %v291, %v297
        %v299 = vrot.slane %v273, 6
        %v300 = vsel %vm288, %v292, %v299
        %313 = vst [vmem:[#allocation2] sm:$0xfc] %v289
        %314 = vst [vmem:[#allocation2 + $0x8] sm:$0xfc] %v290
        %315 = vst [vmem:[#allocation2 + $0x10] sm:$0xfc] %v291
        %316 = vst [vmem:[#allocation2 + $0x18] sm:$0xfc] %v292
        %317 = vst [vmem:[#allocation2 + $0x20] sm:$0xff] %v294
        %318 = vst [vmem:[#allocation2 + $0x28] sm:$0xff] %v296
        %319 = vst [vmem:[#allocation2 + $0x30] sm:$0xff] %v298
        %320 = vst [vmem:[#allocation2 + $0x38] sm:$0xff] %v300
        %321 = vst [vmem:[#allocation2 + $0x40] sm:$0x3] %v293
        %322 = vst [vmem:[#allocation2 + $0x48] sm:$0x3] %v295
        %323 = vst [vmem:[#allocation2 + $0x50] sm:$0x3] %v297
        %324 = vst [vmem:[#allocation2 + $0x58] sm:$0x3] %v299
        %325 = vrot.lane.b32.xlu0 %v245, 32
        %v326 = vpop.permute.xlu0 %325
        %327 = vrot.lane.b32.xlu0 %v249, 32
        %v328 = vpop.permute.xlu0 %327
        %329 = vrot.lane.b32.xlu0 %v246, 32
        %v330 = vpop.permute.xlu0 %329
        %331 = vrot.lane.b32.xlu0 %v250, 32
        %v332 = vpop.permute.xlu0 %331
        %333 = vrot.lane.b32.xlu0 %v247, 32
        %v334 = vpop.permute.xlu0 %333
        %335 = vrot.lane.b32.xlu0 %v251, 32
        %v336 = vpop.permute.xlu0 %335
        %337 = vrot.lane.b32.xlu0 %v248, 32
        %v338 = vpop.permute.xlu0 %337
        %339 = vrot.lane.b32.xlu0 %v252, 32
        %v340 = vpop.permute.xlu0 %339
        %vm341 = vcmp.lt.s32.totalorder %v270, 32
        %v342 = vsel %vm341, %v334, %v338
        %v343 = vsel %vm341, %v336, %v340
        %v344 = vsel %vm341, %v330, %v334
        %v345 = vsel %vm341, %v332, %v336
        %v346 = vsel %vm341, %v326, %v330
        %v347 = vsel %vm341, %v328, %v332
        %v348 = vsel %vm341, %v338, %v326
        %v349 = vsel %vm341, %v340, %v328
        %v358 = vrot.slane %v348, 6
        %v359 = vrot.slane %v346, 6
        %v360 = vrot.slane %v344, 6
        %v361 = vrot.slane %v342, 6
        %v362 = vrot.slane %v349, 6
        %v363 = vsel %vm288, %v358, %v362
        %v364 = vrot.slane %v347, 6
        %v365 = vsel %vm288, %v359, %v364
        %v366 = vrot.slane %v345, 6
        %v367 = vsel %vm288, %v360, %v366
        %v368 = vrot.slane %v343, 6
        %v369 = vsel %vm288, %v361, %v368
        %s382 = scalar_lea.vmem [#allocation2], 96
        %383 = vst [vmem:[%s382] sm:$0xfc] %v358
        %384 = vst [vmem:[%s382 + $0x8] sm:$0xfc] %v359
        %385 = vst [vmem:[%s382 + $0x10] sm:$0xfc] %v360
        %386 = vst [vmem:[%s382 + $0x18] sm:$0xfc] %v361
        %387 = vst [vmem:[%s382 + $0x20] sm:$0xff] %v363
        %388 = vst [vmem:[%s382 + $0x28] sm:$0xff] %v365
        %389 = vst [vmem:[%s382 + $0x30] sm:$0xff] %v367
        %390 = vst [vmem:[%s382 + $0x38] sm:$0xff] %v369
        %391 = vst [vmem:[%s382 + $0x40] sm:$0x3] %v362
        %392 = vst [vmem:[%s382 + $0x48] sm:$0x3] %v364
        %393 = vst [vmem:[%s382 + $0x50] sm:$0x3] %v366
        %394 = vst [vmem:[%s382 + $0x58] sm:$0x3] %v368
        %v403 = vrot.slane %v245, 6
        %v404 = vrot.slane %v246, 6
        %v405 = vrot.slane %v247, 6
        %v406 = vrot.slane %v248, 6
        %v407 = vrot.slane %v249, 6
        %v408 = vsel %vm288, %v403, %v407
        %v409 = vrot.slane %v250, 6
        %v410 = vsel %vm288, %v404, %v409
        %v411 = vrot.slane %v251, 6
        %v412 = vsel %vm288, %v405, %v411
        %v413 = vrot.slane %v252, 6
        %v414 = vsel %vm288, %v406, %v413
        %s427 = scalar_lea.vmem [#allocation2], 192
        %428 = vst [vmem:[%s427] sm:$0xfc] %v403
        %429 = vst [vmem:[%s427 + $0x8] sm:$0xfc] %v404
        %430 = vst [vmem:[%s427 + $0x10] sm:$0xfc] %v405
        %431 = vst [vmem:[%s427 + $0x18] sm:$0xfc] %v406
        %432 = vst [vmem:[%s427 + $0x20] sm:$0xff] %v408
        %433 = vst [vmem:[%s427 + $0x28] sm:$0xff] %v410
        %434 = vst [vmem:[%s427 + $0x30] sm:$0xff] %v412
        %435 = vst [vmem:[%s427 + $0x38] sm:$0xff] %v414
        %436 = vst [vmem:[%s427 + $0x40] sm:$0x3] %v407
        %437 = vst [vmem:[%s427 + $0x48] sm:$0x3] %v409
        %438 = vst [vmem:[%s427 + $0x50] sm:$0x3] %v411
        %439 = vst [vmem:[%s427 + $0x58] sm:$0x3] %v413
        %440 = vrot.lane.b32.xlu0 %v245, 96
        %v441 = vpop.permute.xlu0 %440
        %442 = vrot.lane.b32.xlu0 %v249, 96
        %v443 = vpop.permute.xlu0 %442
        %444 = vrot.lane.b32.xlu0 %v246, 96
        %v445 = vpop.permute.xlu0 %444
        %446 = vrot.lane.b32.xlu0 %v250, 96
        %v447 = vpop.permute.xlu0 %446
        %448 = vrot.lane.b32.xlu0 %v247, 96
        %v449 = vpop.permute.xlu0 %448
        %450 = vrot.lane.b32.xlu0 %v251, 96
        %v451 = vpop.permute.xlu0 %450
        %452 = vrot.lane.b32.xlu0 %v248, 96
        %v453 = vpop.permute.xlu0 %452
        %454 = vrot.lane.b32.xlu0 %v252, 96
        %v455 = vpop.permute.xlu0 %454
        %vm456 = vcmp.lt.s32.totalorder %v270, 96
        %v457 = vsel %vm456, %v449, %v453
        %v458 = vsel %vm456, %v451, %v455
        %v459 = vsel %vm456, %v445, %v449
        %v460 = vsel %vm456, %v447, %v451
        %v461 = vsel %vm456, %v441, %v445
        %v462 = vsel %vm456, %v443, %v447
        %v463 = vsel %vm456, %v453, %v441
        %v464 = vsel %vm456, %v455, %v443
        %v473 = vrot.slane %v461, 6
        %v474 = vrot.slane %v459, 6
        %v475 = vrot.slane %v457, 6
        %v476 = vrot.slane %v463, 6
        %v477 = vrot.slane %v462, 6
        %v478 = vsel %vm288, %v473, %v477
        %v479 = vrot.slane %v460, 6
        %v480 = vsel %vm288, %v474, %v479
        %v481 = vrot.slane %v458, 6
        %v482 = vsel %vm288, %v475, %v481
        %v483 = vrot.slane %v464, 6
        %v484 = vsel %vm288, %v476, %v483
        %s497 = scalar_lea.vmem [#allocation2], 288
        %498 = vst [vmem:[%s497] sm:$0xfc] %v473
        %499 = vst [vmem:[%s497 + $0x8] sm:$0xfc] %v474
        %500 = vst [vmem:[%s497 + $0x10] sm:$0xfc] %v475
        %501 = vst [vmem:[%s497 + $0x18] sm:$0xfc] %v476
        %502 = vst [vmem:[%s497 + $0x20] sm:$0xff] %v478
        %503 = vst [vmem:[%s497 + $0x28] sm:$0xff] %v480
        %504 = vst [vmem:[%s497 + $0x30] sm:$0xff] %v482
        %505 = vst [vmem:[%s497 + $0x38] sm:$0xff] %v484
        %506 = vst [vmem:[%s497 + $0x40] sm:$0x3] %v477
        %507 = vst [vmem:[%s497 + $0x48] sm:$0x3] %v479
        %508 = vst [vmem:[%s497 + $0x50] sm:$0x3] %v481
        %509 = vst [vmem:[%s497 + $0x58] sm:$0x3] %v483
        %s510 = scalar_lea.vmem [#allocation2], 384
        %511 = vst [vmem:[%s510] sm:$0xfc] %v290
        %512 = vst [vmem:[%s510 + $0x8] sm:$0xfc] %v291
        %513 = vst [vmem:[%s510 + $0x10] sm:$0xfc] %v292
        %514 = vst [vmem:[%s510 + $0x18] sm:$0xfc] %v289
        %515 = vst [vmem:[%s510 + $0x20] sm:$0xff] %v296
        %516 = vst [vmem:[%s510 + $0x28] sm:$0xff] %v298
        %517 = vst [vmem:[%s510 + $0x30] sm:$0xff] %v300
        %518 = vst [vmem:[%s510 + $0x38] sm:$0xff] %v294
        %519 = vst [vmem:[%s510 + $0x40] sm:$0x3] %v295
        %520 = vst [vmem:[%s510 + $0x48] sm:$0x3] %v297
        %521 = vst [vmem:[%s510 + $0x50] sm:$0x3] %v299
        %522 = vst [vmem:[%s510 + $0x58] sm:$0x3] %v293
        %v524 = vlaneseq
        %v525 = vshrl.u32 %v524, 7
        %v526 = vsub.s32 0, %v525
        %v527 = vrot.slane %v244, %v526
        %v528 = vlaneseq
        %v529 = vshrl.u32 %v528, 7
        %v530 = vsub.s32 1, %v529
        %v531 = vrot.slane %v244, %v530
        %v532 = vlaneseq
        %v533 = vshrl.u32 %v532, 7
        %v534 = vsub.s32 2, %v533
        %v535 = vrot.slane %v244, %v534
        %v536 = vlaneseq
        %v537 = vshrl.u32 %v536, 7
        %v538 = vsub.s32 3, %v537
        %v539 = vrot.slane %v244, %v538
        %v544 = vld [vmem:[#allocation2] sm:$0xff]
        %v545 = vld [vmem:[#allocation2 + $0x8] sm:$0xff]
        %v546 = vld [vmem:[#allocation2 + $0x10] sm:$0xff]
        %v547 = vld [vmem:[#allocation2 + $0x18] sm:$0xff]
        %v548 = vld [vmem:[#allocation2 + $0x20] sm:$0xff]
        %v549 = vld [vmem:[#allocation2 + $0x28] sm:$0xff]
        %v550 = vld [vmem:[#allocation2 + $0x30] sm:$0xff]
        %v551 = vld [vmem:[#allocation2 + $0x38] sm:$0xff]
        %v552 = vld [vmem:[#allocation6] ss:$8 sm:$0xf]
        %v554 = vlaneseq
        %v555 = vshrl.u32 %v554, 7
        %v556 = vsub.s32 0, %v555
        %v557 = vrot.slane %v552, %v556
        %v558 = vlaneseq
        %v559 = vshrl.u32 %v558, 7
        %v560 = vsub.s32 1, %v559
        %v561 = vrot.slane %v552, %v560
        %v562 = vlaneseq
        %v563 = vshrl.u32 %v562, 7
        %v564 = vsub.s32 2, %v563
        %v565 = vrot.slane %v552, %v564
        %v566 = vlaneseq
        %v567 = vshrl.u32 %v566, 7
        %v568 = vsub.s32 3, %v567
        %v569 = vrot.slane %v552, %v568
        %v574 = vmul.f32 %v544, %v557
        %v575 = vmul.f32 %v545, %v561
        %v576 = vmul.f32 %v546, %v565
        %v577 = vmul.f32 %v547, %v569
        %v578 = vmul.f32 %v548, %v557
        %v579 = vmul.f32 %v549, %v561
        %v580 = vmul.f32 %v550, %v565
        %v581 = vmul.f32 %v551, %v569
        %v582 = vadd.f32 %v527, %v574
        %v583 = vadd.f32 %v531, %v575
        %v584 = vadd.f32 %v535, %v576
        %v585 = vadd.f32 %v539, %v577
        %v586 = vadd.f32 %v527, %v578
        %v587 = vadd.f32 %v531, %v579
        %v588 = vadd.f32 %v535, %v580
        %v589 = vadd.f32 %v539, %v581
        %v590 = vld [vmem:[%s382] sm:$0xff]
        %v591 = vld [vmem:[%s382 + $0x8] sm:$0xff]
        %v592 = vld [vmem:[%s382 + $0x10] sm:$0xff]
        %v593 = vld [vmem:[%s382 + $0x18] sm:$0xff]
        %v594 = vld [vmem:[%s382 + $0x20] sm:$0xff]
        %v595 = vld [vmem:[%s382 + $0x28] sm:$0xff]
        %v596 = vld [vmem:[%s382 + $0x30] sm:$0xff]
        %v597 = vld [vmem:[%s382 + $0x38] sm:$0xff]
        %s598 = scalar_lea.vmem [#allocation6], 1
        %v599 = vld [vmem:[%s598] ss:$8 sm:$0xf]
        %v601 = vlaneseq
        %v602 = vshrl.u32 %v601, 7
        %v603 = vsub.s32 0, %v602
        %v604 = vrot.slane %v599, %v603
        %v605 = vlaneseq
        %v606 = vshrl.u32 %v605, 7
        %v607 = vsub.s32 1, %v606
        %v608 = vrot.slane %v599, %v607
        %v609 = vlaneseq
        %v610 = vshrl.u32 %v609, 7
        %v611 = vsub.s32 2, %v610
        %v612 = vrot.slane %v599, %v611
        %v613 = vlaneseq
        %v614 = vshrl.u32 %v613, 7
        %v615 = vsub.s32 3, %v614
        %v616 = vrot.slane %v599, %v615
        %v621 = vmul.f32 %v590, %v604
        %v622 = vmul.f32 %v591, %v608
        %v623 = vmul.f32 %v592, %v612
        %v624 = vmul.f32 %v593, %v616
        %v625 = vmul.f32 %v594, %v604
        %v626 = vmul.f32 %v595, %v608
        %v627 = vmul.f32 %v596, %v612
        %v628 = vmul.f32 %v597, %v616
        %v629 = vadd.f32 %v582, %v621
        %v630 = vadd.f32 %v583, %v622
        %v631 = vadd.f32 %v584, %v623
        %v632 = vadd.f32 %v585, %v624
        %v633 = vadd.f32 %v586, %v625
        %v634 = vadd.f32 %v587, %v626
        %v635 = vadd.f32 %v588, %v627
        %v636 = vadd.f32 %v589, %v628
        %v637 = vld [vmem:[%s427] sm:$0xff]
        %v638 = vld [vmem:[%s427 + $0x8] sm:$0xff]
        %v639 = vld [vmem:[%s427 + $0x10] sm:$0xff]
        %v640 = vld [vmem:[%s427 + $0x18] sm:$0xff]
        %v641 = vld [vmem:[%s427 + $0x20] sm:$0xff]
        %v642 = vld [vmem:[%s427 + $0x28] sm:$0xff]
        %v643 = vld [vmem:[%s427 + $0x30] sm:$0xff]
        %v644 = vld [vmem:[%s427 + $0x38] sm:$0xff]
        %s645 = scalar_lea.vmem [#allocation6], 2
        %v646 = vld [vmem:[%s645] ss:$8 sm:$0xf]
        %v648 = vlaneseq
        %v649 = vshrl.u32 %v648, 7
        %v650 = vsub.s32 0, %v649
        %v651 = vrot.slane %v646, %v650
        %v652 = vlaneseq
        %v653 = vshrl.u32 %v652, 7
        %v654 = vsub.s32 1, %v653
        %v655 = vrot.slane %v646, %v654
        %v656 = vlaneseq
        %v657 = vshrl.u32 %v656, 7
        %v658 = vsub.s32 2, %v657
        %v659 = vrot.slane %v646, %v658
        %v660 = vlaneseq
        %v661 = vshrl.u32 %v660, 7
        %v662 = vsub.s32 3, %v661
        %v663 = vrot.slane %v646, %v662
        %v668 = vmul.f32 %v637, %v651
        %v669 = vmul.f32 %v638, %v655
        %v670 = vmul.f32 %v639, %v659
        %v671 = vmul.f32 %v640, %v663
        %v672 = vmul.f32 %v641, %v651
        %v673 = vmul.f32 %v642, %v655
        %v674 = vmul.f32 %v643, %v659
        %v675 = vmul.f32 %v644, %v663
        %v676 = vadd.f32 %v629, %v668
        %v677 = vadd.f32 %v630, %v669
        %v678 = vadd.f32 %v631, %v670
        %v679 = vadd.f32 %v632, %v671
        %v680 = vadd.f32 %v633, %v672
        %v681 = vadd.f32 %v634, %v673
        %v682 = vadd.f32 %v635, %v674
        %v683 = vadd.f32 %v636, %v675
        %v684 = vld [vmem:[%s497] sm:$0xff]
        %v685 = vld [vmem:[%s497 + $0x8] sm:$0xff]
        %v686 = vld [vmem:[%s497 + $0x10] sm:$0xff]
        %v687 = vld [vmem:[%s497 + $0x18] sm:$0xff]
        %v688 = vld [vmem:[%s497 + $0x20] sm:$0xff]
        %v689 = vld [vmem:[%s497 + $0x28] sm:$0xff]
        %v690 = vld [vmem:[%s497 + $0x30] sm:$0xff]
        %v691 = vld [vmem:[%s497 + $0x38] sm:$0xff]
        %s692 = scalar_lea.vmem [#allocation6], 3
        %v693 = vld [vmem:[%s692] ss:$8 sm:$0xf]
        %v695 = vlaneseq
        %v696 = vshrl.u32 %v695, 7
        %v697 = vsub.s32 0, %v696
        %v698 = vrot.slane %v693, %v697
        %v699 = vlaneseq
        %v700 = vshrl.u32 %v699, 7
        %v701 = vsub.s32 1, %v700
        %v702 = vrot.slane %v693, %v701
        %v703 = vlaneseq
        %v704 = vshrl.u32 %v703, 7
        %v705 = vsub.s32 2, %v704
        %v706 = vrot.slane %v693, %v705
        %v707 = vlaneseq
        %v708 = vshrl.u32 %v707, 7
        %v709 = vsub.s32 3, %v708
        %v710 = vrot.slane %v693, %v709
        %v715 = vmul.f32 %v684, %v698
        %v716 = vmul.f32 %v685, %v702
        %v717 = vmul.f32 %v686, %v706
        %v718 = vmul.f32 %v687, %v710
        %v719 = vmul.f32 %v688, %v698
        %v720 = vmul.f32 %v689, %v702
        %v721 = vmul.f32 %v690, %v706
        %v722 = vmul.f32 %v691, %v710
        %v723 = vadd.f32 %v676, %v715
        %v724 = vadd.f32 %v677, %v716
        %v725 = vadd.f32 %v678, %v717
        %v726 = vadd.f32 %v679, %v718
        %v727 = vadd.f32 %v680, %v719
        %v728 = vadd.f32 %v681, %v720
        %v729 = vadd.f32 %v682, %v721
        %v730 = vadd.f32 %v683, %v722
        %v731 = vld [vmem:[%s510] sm:$0xff]
        %v732 = vld [vmem:[%s510 + $0x8] sm:$0xff]
        %v733 = vld [vmem:[%s510 + $0x10] sm:$0xff]
        %v734 = vld [vmem:[%s510 + $0x18] sm:$0xff]
        %v735 = vld [vmem:[%s510 + $0x20] sm:$0xff]
        %v736 = vld [vmem:[%s510 + $0x28] sm:$0xff]
        %v737 = vld [vmem:[%s510 + $0x30] sm:$0xff]
        %v738 = vld [vmem:[%s510 + $0x38] sm:$0xff]
        %s739 = scalar_lea.vmem [#allocation6], 4
        %v740 = vld [vmem:[%s739] ss:$8 sm:$0xf]
        %v742 = vlaneseq
        %v743 = vshrl.u32 %v742, 7
        %v744 = vsub.s32 0, %v743
        %v745 = vrot.slane %v740, %v744
        %v746 = vlaneseq
        %v747 = vshrl.u32 %v746, 7
        %v748 = vsub.s32 1, %v747
        %v749 = vrot.slane %v740, %v748
        %v750 = vlaneseq
        %v751 = vshrl.u32 %v750, 7
        %v752 = vsub.s32 2, %v751
        %v753 = vrot.slane %v740, %v752
        %v754 = vlaneseq
        %v755 = vshrl.u32 %v754, 7
        %v756 = vsub.s32 3, %v755
        %v757 = vrot.slane %v740, %v756
        %v762 = vmul.f32 %v731, %v745
        %v763 = vmul.f32 %v732, %v749
        %v764 = vmul.f32 %v733, %v753
        %v765 = vmul.f32 %v734, %v757
        %v766 = vmul.f32 %v735, %v745
        %v767 = vmul.f32 %v736, %v749
        %v768 = vmul.f32 %v737, %v753
        %v769 = vmul.f32 %v738, %v757
        %v770 = vadd.f32 %v723, %v762
        %v771 = vadd.f32 %v724, %v763
        %v772 = vadd.f32 %v725, %v764
        %v773 = vadd.f32 %v726, %v765
        %v774 = vadd.f32 %v727, %v766
        %v775 = vadd.f32 %v728, %v767
        %v776 = vadd.f32 %v729, %v768
        %v777 = vadd.f32 %v730, %v769
        %v778 = vld [vmem:[#allocation2] sm:$0xfe]
        %v779 = vld [vmem:[#allocation2 + $0x8] sm:$0xfe]
        %v780 = vld [vmem:[#allocation2 + $0x10] sm:$0xfe]
        %v781 = vld [vmem:[#allocation2 + $0x18] sm:$0xfe]
        %v782 = vld [vmem:[#allocation2 + $0x40] sm:$0x1]
        %v783 = vld [vmem:[#allocation2 + $0x48] sm:$0x1]
        %v784 = vld [vmem:[#allocation2 + $0x50] sm:$0x1]
        %v785 = vld [vmem:[#allocation2 + $0x58] sm:$0x1]
        %s786 = scalar_lea.vmem [#allocation6], 5
        %v787 = vld [vmem:[%s786] ss:$8 sm:$0xf]
        %v789 = vlaneseq
        %v790 = vshrl.u32 %v789, 7
        %v791 = vsub.s32 0, %v790
        %v792 = vrot.slane %v787, %v791
        %v793 = vlaneseq
        %v794 = vshrl.u32 %v793, 7
        %v795 = vsub.s32 1, %v794
        %v796 = vrot.slane %v787, %v795
        %v797 = vlaneseq
        %v798 = vshrl.u32 %v797, 7
        %v799 = vsub.s32 2, %v798
        %v800 = vrot.slane %v787, %v799
        %v801 = vlaneseq
        %v802 = vshrl.u32 %v801, 7
        %v803 = vsub.s32 3, %v802
        %v804 = vrot.slane %v787, %v803
        %v809 = vmul.f32 %v778, %v792
        %v810 = vmul.f32 %v779, %v796
        %v811 = vmul.f32 %v780, %v800
        %v812 = vmul.f32 %v781, %v804
        %v813 = vmul.f32 %v548, %v792
        %v814 = vmul.f32 %v549, %v796
        %v815 = vmul.f32 %v550, %v800
        %v816 = vmul.f32 %v551, %v804
        %v817 = vmul.f32 %v782, %v792
        %v818 = vmul.f32 %v783, %v796
        %v819 = vmul.f32 %v784, %v800
        %v820 = vmul.f32 %v785, %v804
        %vm833 = vcmask 1046528
        %v834 = vrot.slane %v809, 1
        %v835 = vrot.slane %v813, 1
        %v836 = vsel %vm833, %v834, %v835
        %v837 = vrot.slane %v810, 1
        %v838 = vrot.slane %v814, 1
        %v839 = vsel %vm833, %v837, %v838
        %v840 = vrot.slane %v811, 1
        %v841 = vrot.slane %v815, 1
        %v842 = vsel %vm833, %v840, %v841
        %v843 = vrot.slane %v812, 1
        %v844 = vrot.slane %v816, 1
        %v845 = vsel %vm833, %v843, %v844
        %v846 = vrot.slane %v817, 1
        %v847 = vsel %vm833, %v835, %v846
        %v848 = vrot.slane %v818, 1
        %v849 = vsel %vm833, %v838, %v848
        %v850 = vrot.slane %v819, 1
        %v851 = vsel %vm833, %v841, %v850
        %v852 = vrot.slane %v820, 1
        %v853 = vsel %vm833, %v844, %v852
        %v862 = vadd.f32 %v770, %v836
        %v863 = vadd.f32 %v771, %v839
        %v864 = vadd.f32 %v772, %v842
        %v865 = vadd.f32 %v773, %v845
        %v866 = vadd.f32 %v774, %v847
        %v867 = vadd.f32 %v775, %v849
        %v868 = vadd.f32 %v776, %v851
        %v869 = vadd.f32 %v777, %v853
        %v870 = vld [vmem:[%s382] sm:$0xfe]
        %v871 = vld [vmem:[%s382 + $0x8] sm:$0xfe]
        %v872 = vld [vmem:[%s382 + $0x10] sm:$0xfe]
        %v873 = vld [vmem:[%s382 + $0x18] sm:$0xfe]
        %v874 = vld [vmem:[%s382 + $0x40] sm:$0x1]
        %v875 = vld [vmem:[%s382 + $0x48] sm:$0x1]
        %v876 = vld [vmem:[%s382 + $0x50] sm:$0x1]
        %v877 = vld [vmem:[%s382 + $0x58] sm:$0x1]
        %s878 = scalar_lea.vmem [#allocation6], 6
        %v879 = vld [vmem:[%s878] ss:$8 sm:$0xf]
        %v881 = vlaneseq
        %v882 = vshrl.u32 %v881, 7
        %v883 = vsub.s32 0, %v882
        %v884 = vrot.slane %v879, %v883
        %v885 = vlaneseq
        %v886 = vshrl.u32 %v885, 7
        %v887 = vsub.s32 1, %v886
        %v888 = vrot.slane %v879, %v887
        %v889 = vlaneseq
        %v890 = vshrl.u32 %v889, 7
        %v891 = vsub.s32 2, %v890
        %v892 = vrot.slane %v879, %v891
        %v893 = vlaneseq
        %v894 = vshrl.u32 %v893, 7
        %v895 = vsub.s32 3, %v894
        %v896 = vrot.slane %v879, %v895
        %v901 = vmul.f32 %v870, %v884
        %v902 = vmul.f32 %v871, %v888
        %v903 = vmul.f32 %v872, %v892
        %v904 = vmul.f32 %v873, %v896
        %v905 = vmul.f32 %v594, %v884
        %v906 = vmul.f32 %v595, %v888
        %v907 = vmul.f32 %v596, %v892
        %v908 = vmul.f32 %v597, %v896
        %v909 = vmul.f32 %v874, %v884
        %v910 = vmul.f32 %v875, %v888
        %v911 = vmul.f32 %v876, %v892
        %v912 = vmul.f32 %v877, %v896
        %v925 = vrot.slane %v901, 1
        %v926 = vrot.slane %v905, 1
        %v927 = vsel %vm833, %v925, %v926
        %v928 = vrot.slane %v902, 1
        %v929 = vrot.slane %v906, 1
        %v930 = vsel %vm833, %v928, %v929
        %v931 = vrot.slane %v903, 1
        %v932 = vrot.slane %v907, 1
        %v933 = vsel %vm833, %v931, %v932
        %v934 = vrot.slane %v904, 1
        %v935 = vrot.slane %v908, 1
        %v936 = vsel %vm833, %v934, %v935
        %v937 = vrot.slane %v909, 1
        %v938 = vsel %vm833, %v926, %v937
        %v939 = vrot.slane %v910, 1
        %v940 = vsel %vm833, %v929, %v939
        %v941 = vrot.slane %v911, 1
        %v942 = vsel %vm833, %v932, %v941
        %v943 = vrot.slane %v912, 1
        %v944 = vsel %vm833, %v935, %v943
        %v953 = vadd.f32 %v862, %v927
        %v954 = vadd.f32 %v863, %v930
        %v955 = vadd.f32 %v864, %v933
        %v956 = vadd.f32 %v865, %v936
        %v957 = vadd.f32 %v866, %v938
        %v958 = vadd.f32 %v867, %v940
        %v959 = vadd.f32 %v868, %v942
        %v960 = vadd.f32 %v869, %v944
        %v961 = vld [vmem:[%s427] sm:$0xfe]
        %v962 = vld [vmem:[%s427 + $0x8] sm:$0xfe]
        %v963 = vld [vmem:[%s427 + $0x10] sm:$0xfe]
        %v964 = vld [vmem:[%s427 + $0x18] sm:$0xfe]
        %v965 = vld [vmem:[%s427 + $0x40] sm:$0x1]
        %v966 = vld [vmem:[%s427 + $0x48] sm:$0x1]
        %v967 = vld [vmem:[%s427 + $0x50] sm:$0x1]
        %v968 = vld [vmem:[%s427 + $0x58] sm:$0x1]
        %s969 = scalar_lea.vmem [#allocation6], 7
        %v970 = vld [vmem:[%s969] ss:$8 sm:$0xf]
        %v972 = vlaneseq
        %v973 = vshrl.u32 %v972, 7
        %v974 = vsub.s32 0, %v973
        %v975 = vrot.slane %v970, %v974
        %v976 = vlaneseq
        %v977 = vshrl.u32 %v976, 7
        %v978 = vsub.s32 1, %v977
        %v979 = vrot.slane %v970, %v978
        %v980 = vlaneseq
        %v981 = vshrl.u32 %v980, 7
        %v982 = vsub.s32 2, %v981
        %v983 = vrot.slane %v970, %v982
        %v984 = vlaneseq
        %v985 = vshrl.u32 %v984, 7
        %v986 = vsub.s32 3, %v985
        %v987 = vrot.slane %v970, %v986
        %v992 = vmul.f32 %v961, %v975
        %v993 = vmul.f32 %v962, %v979
        %v994 = vmul.f32 %v963, %v983
        %v995 = vmul.f32 %v964, %v987
        %v996 = vmul.f32 %v641, %v975
        %v997 = vmul.f32 %v642, %v979
        %v998 = vmul.f32 %v643, %v983
        %v999 = vmul.f32 %v644, %v987
        %v1000 = vmul.f32 %v965, %v975
        %v1001 = vmul.f32 %v966, %v979
        %v1002 = vmul.f32 %v967, %v983
        %v1003 = vmul.f32 %v968, %v987
        %v1016 = vrot.slane %v992, 1
        %v1017 = vrot.slane %v996, 1
        %v1018 = vsel %vm833, %v1016, %v1017
        %v1019 = vrot.slane %v993, 1
        %v1020 = vrot.slane %v997, 1
        %v1021 = vsel %vm833, %v1019, %v1020
        %v1022 = vrot.slane %v994, 1
        %v1023 = vrot.slane %v998, 1
        %v1024 = vsel %vm833, %v1022, %v1023
        %v1025 = vrot.slane %v995, 1
        %v1026 = vrot.slane %v999, 1
        %v1027 = vsel %vm833, %v1025, %v1026
        %v1028 = vrot.slane %v1000, 1
        %v1029 = vsel %vm833, %v1017, %v1028
        %v1030 = vrot.slane %v1001, 1
        %v1031 = vsel %vm833, %v1020, %v1030
        %v1032 = vrot.slane %v1002, 1
        %v1033 = vsel %vm833, %v1023, %v1032
        %v1034 = vrot.slane %v1003, 1
        %v1035 = vsel %vm833, %v1026, %v1034
        %v1044 = vadd.f32 %v953, %v1018
        %v1045 = vadd.f32 %v954, %v1021
        %v1046 = vadd.f32 %v955, %v1024
        %v1047 = vadd.f32 %v956, %v1027
        %v1048 = vadd.f32 %v957, %v1029
        %v1049 = vadd.f32 %v958, %v1031
        %v1050 = vadd.f32 %v959, %v1033
        %v1051 = vadd.f32 %v960, %v1035
        %v1052 = vld [vmem:[%s497] sm:$0xfe]
        %v1053 = vld [vmem:[%s497 + $0x8] sm:$0xfe]
        %v1054 = vld [vmem:[%s497 + $0x10] sm:$0xfe]
        %v1055 = vld [vmem:[%s497 + $0x18] sm:$0xfe]
        %v1056 = vld [vmem:[%s497 + $0x40] sm:$0x1]
        %v1057 = vld [vmem:[%s497 + $0x48] sm:$0x1]
        %v1058 = vld [vmem:[%s497 + $0x50] sm:$0x1]
        %v1059 = vld [vmem:[%s497 + $0x58] sm:$0x1]
        %s1060 = scalar_lea.vmem [#allocation6], 32
        %v1061 = vld [vmem:[%s1060] ss:$8 sm:$0xf]
        %v1063 = vlaneseq
        %v1064 = vshrl.u32 %v1063, 7
        %v1065 = vsub.s32 0, %v1064
        %v1066 = vrot.slane %v1061, %v1065
        %v1067 = vlaneseq
        %v1068 = vshrl.u32 %v1067, 7
        %v1069 = vsub.s32 1, %v1068
        %v1070 = vrot.slane %v1061, %v1069
        %v1071 = vlaneseq
        %v1072 = vshrl.u32 %v1071, 7
        %v1073 = vsub.s32 2, %v1072
        %v1074 = vrot.slane %v1061, %v1073
        %v1075 = vlaneseq
        %v1076 = vshrl.u32 %v1075, 7
        %v1077 = vsub.s32 3, %v1076
        %v1078 = vrot.slane %v1061, %v1077
        %v1083 = vmul.f32 %v1052, %v1066
        %v1084 = vmul.f32 %v1053, %v1070
        %v1085 = vmul.f32 %v1054, %v1074
        %v1086 = vmul.f32 %v1055, %v1078
        %v1087 = vmul.f32 %v688, %v1066
        %v1088 = vmul.f32 %v689, %v1070
        %v1089 = vmul.f32 %v690, %v1074
        %v1090 = vmul.f32 %v691, %v1078
        %v1091 = vmul.f32 %v1056, %v1066
        %v1092 = vmul.f32 %v1057, %v1070
        %v1093 = vmul.f32 %v1058, %v1074
        %v1094 = vmul.f32 %v1059, %v1078
        %v1107 = vrot.slane %v1083, 1
        %v1108 = vrot.slane %v1087, 1
        %v1109 = vsel %vm833, %v1107, %v1108
        %v1110 = vrot.slane %v1084, 1
        %v1111 = vrot.slane %v1088, 1
        %v1112 = vsel %vm833, %v1110, %v1111
        %v1113 = vrot.slane %v1085, 1
        %v1114 = vrot.slane %v1089, 1
        %v1115 = vsel %vm833, %v1113, %v1114
        %v1116 = vrot.slane %v1086, 1
        %v1117 = vrot.slane %v1090, 1
        %v1118 = vsel %vm833, %v1116, %v1117
        %v1119 = vrot.slane %v1091, 1
        %v1120 = vsel %vm833, %v1108, %v1119
        %v1121 = vrot.slane %v1092, 1
        %v1122 = vsel %vm833, %v1111, %v1121
        %v1123 = vrot.slane %v1093, 1
        %v1124 = vsel %vm833, %v1114, %v1123
        %v1125 = vrot.slane %v1094, 1
        %v1126 = vsel %vm833, %v1117, %v1125
        %v1135 = vadd.f32 %v1044, %v1109
        %v1136 = vadd.f32 %v1045, %v1112
        %v1137 = vadd.f32 %v1046, %v1115
        %v1138 = vadd.f32 %v1047, %v1118
        %v1139 = vadd.f32 %v1048, %v1120
        %v1140 = vadd.f32 %v1049, %v1122
        %v1141 = vadd.f32 %v1050, %v1124
        %v1142 = vadd.f32 %v1051, %v1126
        %v1143 = vld [vmem:[%s510] sm:$0xfe]
        %v1144 = vld [vmem:[%s510 + $0x8] sm:$0xfe]
        %v1145 = vld [vmem:[%s510 + $0x10] sm:$0xfe]
        %v1146 = vld [vmem:[%s510 + $0x18] sm:$0xfe]
        %v1147 = vld [vmem:[%s510 + $0x40] sm:$0x1]
        %v1148 = vld [vmem:[%s510 + $0x48] sm:$0x1]
        %v1149 = vld [vmem:[%s510 + $0x50] sm:$0x1]
        %v1150 = vld [vmem:[%s510 + $0x58] sm:$0x1]
        %s1151 = scalar_lea.vmem [#allocation6], 33
        %v1152 = vld [vmem:[%s1151] ss:$8 sm:$0xf]
        %v1154 = vlaneseq
        %v1155 = vshrl.u32 %v1154, 7
        %v1156 = vsub.s32 0, %v1155
        %v1157 = vrot.slane %v1152, %v1156
        %v1158 = vlaneseq
        %v1159 = vshrl.u32 %v1158, 7
        %v1160 = vsub.s32 1, %v1159
        %v1161 = vrot.slane %v1152, %v1160
        %v1162 = vlaneseq
        %v1163 = vshrl.u32 %v1162, 7
        %v1164 = vsub.s32 2, %v1163
        %v1165 = vrot.slane %v1152, %v1164
        %v1166 = vlaneseq
        %v1167 = vshrl.u32 %v1166, 7
        %v1168 = vsub.s32 3, %v1167
        %v1169 = vrot.slane %v1152, %v1168
        %v1174 = vmul.f32 %v1143, %v1157
        %v1175 = vmul.f32 %v1144, %v1161
        %v1176 = vmul.f32 %v1145, %v1165
        %v1177 = vmul.f32 %v1146, %v1169
        %v1178 = vmul.f32 %v735, %v1157
        %v1179 = vmul.f32 %v736, %v1161
        %v1180 = vmul.f32 %v737, %v1165
        %v1181 = vmul.f32 %v738, %v1169
        %v1182 = vmul.f32 %v1147, %v1157
        %v1183 = vmul.f32 %v1148, %v1161
        %v1184 = vmul.f32 %v1149, %v1165
        %v1185 = vmul.f32 %v1150, %v1169
        %v1198 = vrot.slane %v1174, 1
        %v1199 = vrot.slane %v1178, 1
        %v1200 = vsel %vm833, %v1198, %v1199
        %v1201 = vrot.slane %v1175, 1
        %v1202 = vrot.slane %v1179, 1
        %v1203 = vsel %vm833, %v1201, %v1202
        %v1204 = vrot.slane %v1176, 1
        %v1205 = vrot.slane %v1180, 1
        %v1206 = vsel %vm833, %v1204, %v1205
        %v1207 = vrot.slane %v1177, 1
        %v1208 = vrot.slane %v1181, 1
        %v1209 = vsel %vm833, %v1207, %v1208
        %v1210 = vrot.slane %v1182, 1
        %v1211 = vsel %vm833, %v1199, %v1210
        %v1212 = vrot.slane %v1183, 1
        %v1213 = vsel %vm833, %v1202, %v1212
        %v1214 = vrot.slane %v1184, 1
        %v1215 = vsel %vm833, %v1205, %v1214
        %v1216 = vrot.slane %v1185, 1
        %v1217 = vsel %vm833, %v1208, %v1216
        %v1226 = vadd.f32 %v1135, %v1200
        %v1227 = vadd.f32 %v1136, %v1203
        %v1228 = vadd.f32 %v1137, %v1206
        %v1229 = vadd.f32 %v1138, %v1209
        %v1230 = vadd.f32 %v1139, %v1211
        %v1231 = vadd.f32 %v1140, %v1213
        %v1232 = vadd.f32 %v1141, %v1215
        %v1233 = vadd.f32 %v1142, %v1217
        %v1234 = vld [vmem:[#allocation2] sm:$0xfc]
        %v1235 = vld [vmem:[#allocation2 + $0x8] sm:$0xfc]
        %v1236 = vld [vmem:[#allocation2 + $0x10] sm:$0xfc]
        %v1237 = vld [vmem:[#allocation2 + $0x18] sm:$0xfc]
        %v1238 = vld [vmem:[#allocation2 + $0x40] sm:$0x3]
        %v1239 = vld [vmem:[#allocation2 + $0x48] sm:$0x3]
        %v1240 = vld [vmem:[#allocation2 + $0x50] sm:$0x3]
        %v1241 = vld [vmem:[#allocation2 + $0x58] sm:$0x3]
        %s1242 = scalar_lea.vmem [#allocation6], 34
        %v1243 = vld [vmem:[%s1242] ss:$8 sm:$0xf]
        %v1245 = vlaneseq
        %v1246 = vshrl.u32 %v1245, 7
        %v1247 = vsub.s32 0, %v1246
        %v1248 = vrot.slane %v1243, %v1247
        %v1249 = vlaneseq
        %v1250 = vshrl.u32 %v1249, 7
        %v1251 = vsub.s32 1, %v1250
        %v1252 = vrot.slane %v1243, %v1251
        %v1253 = vlaneseq
        %v1254 = vshrl.u32 %v1253, 7
        %v1255 = vsub.s32 2, %v1254
        %v1256 = vrot.slane %v1243, %v1255
        %v1257 = vlaneseq
        %v1258 = vshrl.u32 %v1257, 7
        %v1259 = vsub.s32 3, %v1258
        %v1260 = vrot.slane %v1243, %v1259
        %v1265 = vmul.f32 %v1234, %v1248
        %v1266 = vmul.f32 %v1235, %v1252
        %v1267 = vmul.f32 %v1236, %v1256
        %v1268 = vmul.f32 %v1237, %v1260
        %v1269 = vmul.f32 %v548, %v1248
        %v1270 = vmul.f32 %v549, %v1252
        %v1271 = vmul.f32 %v550, %v1256
        %v1272 = vmul.f32 %v551, %v1260
        %v1273 = vmul.f32 %v1238, %v1248
        %v1274 = vmul.f32 %v1239, %v1252
        %v1275 = vmul.f32 %v1240, %v1256
        %v1276 = vmul.f32 %v1241, %v1260
        %vm1289 = vcmask 1045504
        %v1290 = vrot.slane %v1265, 2
        %v1291 = vrot.slane %v1269, 2
        %v1292 = vsel %vm1289, %v1290, %v1291
        %v1293 = vrot.slane %v1266, 2
        %v1294 = vrot.slane %v1270, 2
        %v1295 = vsel %vm1289, %v1293, %v1294
        %v1296 = vrot.slane %v1267, 2
        %v1297 = vrot.slane %v1271, 2
        %v1298 = vsel %vm1289, %v1296, %v1297
        %v1299 = vrot.slane %v1268, 2
        %v1300 = vrot.slane %v1272, 2
        %v1301 = vsel %vm1289, %v1299, %v1300
        %v1302 = vrot.slane %v1273, 2
        %v1303 = vsel %vm1289, %v1291, %v1302
        %v1304 = vrot.slane %v1274, 2
        %v1305 = vsel %vm1289, %v1294, %v1304
        %v1306 = vrot.slane %v1275, 2
        %v1307 = vsel %vm1289, %v1297, %v1306
        %v1308 = vrot.slane %v1276, 2
        %v1309 = vsel %vm1289, %v1300, %v1308
        %v1318 = vadd.f32 %v1226, %v1292
        %v1319 = vadd.f32 %v1227, %v1295
        %v1320 = vadd.f32 %v1228, %v1298
        %v1321 = vadd.f32 %v1229, %v1301
        %v1322 = vadd.f32 %v1230, %v1303
        %v1323 = vadd.f32 %v1231, %v1305
        %v1324 = vadd.f32 %v1232, %v1307
        %v1325 = vadd.f32 %v1233, %v1309
        %v1326 = vld [vmem:[%s382] sm:$0xfc]
        %v1327 = vld [vmem:[%s382 + $0x8] sm:$0xfc]
        %v1328 = vld [vmem:[%s382 + $0x10] sm:$0xfc]
        %v1329 = vld [vmem:[%s382 + $0x18] sm:$0xfc]
        %v1330 = vld [vmem:[%s382 + $0x40] sm:$0x3]
        %v1331 = vld [vmem:[%s382 + $0x48] sm:$0x3]
        %v1332 = vld [vmem:[%s382 + $0x50] sm:$0x3]
        %v1333 = vld [vmem:[%s382 + $0x58] sm:$0x3]
        %s1334 = scalar_lea.vmem [#allocation6], 35
        %v1335 = vld [vmem:[%s1334] ss:$8 sm:$0xf]
        %v1337 = vlaneseq
        %v1338 = vshrl.u32 %v1337, 7
        %v1339 = vsub.s32 0, %v1338
        %v1340 = vrot.slane %v1335, %v1339
        %v1341 = vlaneseq
        %v1342 = vshrl.u32 %v1341, 7
        %v1343 = vsub.s32 1, %v1342
        %v1344 = vrot.slane %v1335, %v1343
        %v1345 = vlaneseq
        %v1346 = vshrl.u32 %v1345, 7
        %v1347 = vsub.s32 2, %v1346
        %v1348 = vrot.slane %v1335, %v1347
        %v1349 = vlaneseq
        %v1350 = vshrl.u32 %v1349, 7
        %v1351 = vsub.s32 3, %v1350
        %v1352 = vrot.slane %v1335, %v1351
        %v1357 = vmul.f32 %v1326, %v1340
        %v1358 = vmul.f32 %v1327, %v1344
        %v1359 = vmul.f32 %v1328, %v1348
        %v1360 = vmul.f32 %v1329, %v1352
        %v1361 = vmul.f32 %v594, %v1340
        %v1362 = vmul.f32 %v595, %v1344
        %v1363 = vmul.f32 %v596, %v1348
        %v1364 = vmul.f32 %v597, %v1352
        %v1365 = vmul.f32 %v1330, %v1340
        %v1366 = vmul.f32 %v1331, %v1344
        %v1367 = vmul.f32 %v1332, %v1348
        %v1368 = vmul.f32 %v1333, %v1352
        %v1381 = vrot.slane %v1357, 2
        %v1382 = vrot.slane %v1361, 2
        %v1383 = vsel %vm1289, %v1381, %v1382
        %v1384 = vrot.slane %v1358, 2
        %v1385 = vrot.slane %v1362, 2
        %v1386 = vsel %vm1289, %v1384, %v1385
        %v1387 = vrot.slane %v1359, 2
        %v1388 = vrot.slane %v1363, 2
        %v1389 = vsel %vm1289, %v1387, %v1388
        %v1390 = vrot.slane %v1360, 2
        %v1391 = vrot.slane %v1364, 2
        %v1392 = vsel %vm1289, %v1390, %v1391
        %v1393 = vrot.slane %v1365, 2
        %v1394 = vsel %vm1289, %v1382, %v1393
        %v1395 = vrot.slane %v1366, 2
        %v1396 = vsel %vm1289, %v1385, %v1395
        %v1397 = vrot.slane %v1367, 2
        %v1398 = vsel %vm1289, %v1388, %v1397
        %v1399 = vrot.slane %v1368, 2
        %v1400 = vsel %vm1289, %v1391, %v1399
        %v1409 = vadd.f32 %v1318, %v1383
        %v1410 = vadd.f32 %v1319, %v1386
        %v1411 = vadd.f32 %v1320, %v1389
        %v1412 = vadd.f32 %v1321, %v1392
        %v1413 = vadd.f32 %v1322, %v1394
        %v1414 = vadd.f32 %v1323, %v1396
        %v1415 = vadd.f32 %v1324, %v1398
        %v1416 = vadd.f32 %v1325, %v1400
        %v1417 = vld [vmem:[%s427] sm:$0xfc]
        %v1418 = vld [vmem:[%s427 + $0x8] sm:$0xfc]
        %v1419 = vld [vmem:[%s427 + $0x10] sm:$0xfc]
        %v1420 = vld [vmem:[%s427 + $0x18] sm:$0xfc]
        %v1421 = vld [vmem:[%s427 + $0x40] sm:$0x3]
        %v1422 = vld [vmem:[%s427 + $0x48] sm:$0x3]
        %v1423 = vld [vmem:[%s427 + $0x50] sm:$0x3]
        %v1424 = vld [vmem:[%s427 + $0x58] sm:$0x3]
        %s1425 = scalar_lea.vmem [#allocation6], 36
        %v1426 = vld [vmem:[%s1425] ss:$8 sm:$0xf]
        %v1428 = vlaneseq
        %v1429 = vshrl.u32 %v1428, 7
        %v1430 = vsub.s32 0, %v1429
        %v1431 = vrot.slane %v1426, %v1430
        %v1432 = vlaneseq
        %v1433 = vshrl.u32 %v1432, 7
        %v1434 = vsub.s32 1, %v1433
        %v1435 = vrot.slane %v1426, %v1434
        %v1436 = vlaneseq
        %v1437 = vshrl.u32 %v1436, 7
        %v1438 = vsub.s32 2, %v1437
        %v1439 = vrot.slane %v1426, %v1438
        %v1440 = vlaneseq
        %v1441 = vshrl.u32 %v1440, 7
        %v1442 = vsub.s32 3, %v1441
        %v1443 = vrot.slane %v1426, %v1442
        %v1448 = vmul.f32 %v1417, %v1431
        %v1449 = vmul.f32 %v1418, %v1435
        %v1450 = vmul.f32 %v1419, %v1439
        %v1451 = vmul.f32 %v1420, %v1443
        %v1452 = vmul.f32 %v641, %v1431
        %v1453 = vmul.f32 %v642, %v1435
        %v1454 = vmul.f32 %v643, %v1439
        %v1455 = vmul.f32 %v644, %v1443
        %v1456 = vmul.f32 %v1421, %v1431
        %v1457 = vmul.f32 %v1422, %v1435
        %v1458 = vmul.f32 %v1423, %v1439
        %v1459 = vmul.f32 %v1424, %v1443
        %v1472 = vrot.slane %v1448, 2
        %v1473 = vrot.slane %v1452, 2
        %v1474 = vsel %vm1289, %v1472, %v1473
        %v1475 = vrot.slane %v1449, 2
        %v1476 = vrot.slane %v1453, 2
        %v1477 = vsel %vm1289, %v1475, %v1476
        %v1478 = vrot.slane %v1450, 2
        %v1479 = vrot.slane %v1454, 2
        %v1480 = vsel %vm1289, %v1478, %v1479
        %v1481 = vrot.slane %v1451, 2
        %v1482 = vrot.slane %v1455, 2
        %v1483 = vsel %vm1289, %v1481, %v1482
        %v1484 = vrot.slane %v1456, 2
        %v1485 = vsel %vm1289, %v1473, %v1484
        %v1486 = vrot.slane %v1457, 2
        %v1487 = vsel %vm1289, %v1476, %v1486
        %v1488 = vrot.slane %v1458, 2
        %v1489 = vsel %vm1289, %v1479, %v1488
        %v1490 = vrot.slane %v1459, 2
        %v1491 = vsel %vm1289, %v1482, %v1490
        %v1500 = vadd.f32 %v1409, %v1474
        %v1501 = vadd.f32 %v1410, %v1477
        %v1502 = vadd.f32 %v1411, %v1480
        %v1503 = vadd.f32 %v1412, %v1483
        %v1504 = vadd.f32 %v1413, %v1485
        %v1505 = vadd.f32 %v1414, %v1487
        %v1506 = vadd.f32 %v1415, %v1489
        %v1507 = vadd.f32 %v1416, %v1491
        %v1508 = vld [vmem:[%s497] sm:$0xfc]
        %v1509 = vld [vmem:[%s497 + $0x8] sm:$0xfc]
        %v1510 = vld [vmem:[%s497 + $0x10] sm:$0xfc]
        %v1511 = vld [vmem:[%s497 + $0x18] sm:$0xfc]
        %v1512 = vld [vmem:[%s497 + $0x40] sm:$0x3]
        %v1513 = vld [vmem:[%s497 + $0x48] sm:$0x3]
        %v1514 = vld [vmem:[%s497 + $0x50] sm:$0x3]
        %v1515 = vld [vmem:[%s497 + $0x58] sm:$0x3]
        %s1516 = scalar_lea.vmem [#allocation6], 37
        %v1517 = vld [vmem:[%s1516] ss:$8 sm:$0xf]
        %v1519 = vlaneseq
        %v1520 = vshrl.u32 %v1519, 7
        %v1521 = vsub.s32 0, %v1520
        %v1522 = vrot.slane %v1517, %v1521
        %v1523 = vlaneseq
        %v1524 = vshrl.u32 %v1523, 7
        %v1525 = vsub.s32 1, %v1524
        %v1526 = vrot.slane %v1517, %v1525
        %v1527 = vlaneseq
        %v1528 = vshrl.u32 %v1527, 7
        %v1529 = vsub.s32 2, %v1528
        %v1530 = vrot.slane %v1517, %v1529
        %v1531 = vlaneseq
        %v1532 = vshrl.u32 %v1531, 7
        %v1533 = vsub.s32 3, %v1532
        %v1534 = vrot.slane %v1517, %v1533
        %v1539 = vmul.f32 %v1508, %v1522
        %v1540 = vmul.f32 %v1509, %v1526
        %v1541 = vmul.f32 %v1510, %v1530
        %v1542 = vmul.f32 %v1511, %v1534
        %v1543 = vmul.f32 %v688, %v1522
        %v1544 = vmul.f32 %v689, %v1526
        %v1545 = vmul.f32 %v690, %v1530
        %v1546 = vmul.f32 %v691, %v1534
        %v1547 = vmul.f32 %v1512, %v1522
        %v1548 = vmul.f32 %v1513, %v1526
        %v1549 = vmul.f32 %v1514, %v1530
        %v1550 = vmul.f32 %v1515, %v1534
        %v1563 = vrot.slane %v1539, 2
        %v1564 = vrot.slane %v1543, 2
        %v1565 = vsel %vm1289, %v1563, %v1564
        %v1566 = vrot.slane %v1540, 2
        %v1567 = vrot.slane %v1544, 2
        %v1568 = vsel %vm1289, %v1566, %v1567
        %v1569 = vrot.slane %v1541, 2
        %v1570 = vrot.slane %v1545, 2
        %v1571 = vsel %vm1289, %v1569, %v1570
        %v1572 = vrot.slane %v1542, 2
        %v1573 = vrot.slane %v1546, 2
        %v1574 = vsel %vm1289, %v1572, %v1573
        %v1575 = vrot.slane %v1547, 2
        %v1576 = vsel %vm1289, %v1564, %v1575
        %v1577 = vrot.slane %v1548, 2
        %v1578 = vsel %vm1289, %v1567, %v1577
        %v1579 = vrot.slane %v1549, 2
        %v1580 = vsel %vm1289, %v1570, %v1579
        %v1581 = vrot.slane %v1550, 2
        %v1582 = vsel %vm1289, %v1573, %v1581
        %v1591 = vadd.f32 %v1500, %v1565
        %v1592 = vadd.f32 %v1501, %v1568
        %v1593 = vadd.f32 %v1502, %v1571
        %v1594 = vadd.f32 %v1503, %v1574
        %v1595 = vadd.f32 %v1504, %v1576
        %v1596 = vadd.f32 %v1505, %v1578
        %v1597 = vadd.f32 %v1506, %v1580
        %v1598 = vadd.f32 %v1507, %v1582
        %v1599 = vld [vmem:[%s510] sm:$0xfc]
        %v1600 = vld [vmem:[%s510 + $0x8] sm:$0xfc]
        %v1601 = vld [vmem:[%s510 + $0x10] sm:$0xfc]
        %v1602 = vld [vmem:[%s510 + $0x18] sm:$0xfc]
        %v1603 = vld [vmem:[%s510 + $0x40] sm:$0x3]
        %v1604 = vld [vmem:[%s510 + $0x48] sm:$0x3]
        %v1605 = vld [vmem:[%s510 + $0x50] sm:$0x3]
        %v1606 = vld [vmem:[%s510 + $0x58] sm:$0x3]
        %s1607 = scalar_lea.vmem [#allocation6], 38
        %v1608 = vld [vmem:[%s1607] ss:$8 sm:$0xf]
        %v1610 = vlaneseq
        %v1611 = vshrl.u32 %v1610, 7
        %v1612 = vsub.s32 0, %v1611
        %v1613 = vrot.slane %v1608, %v1612
        %v1614 = vlaneseq
        %v1615 = vshrl.u32 %v1614, 7
        %v1616 = vsub.s32 1, %v1615
        %v1617 = vrot.slane %v1608, %v1616
        %v1618 = vlaneseq
        %v1619 = vshrl.u32 %v1618, 7
        %v1620 = vsub.s32 2, %v1619
        %v1621 = vrot.slane %v1608, %v1620
        %v1622 = vlaneseq
        %v1623 = vshrl.u32 %v1622, 7
        %v1624 = vsub.s32 3, %v1623
        %v1625 = vrot.slane %v1608, %v1624
        %v1630 = vmul.f32 %v1599, %v1613
        %v1631 = vmul.f32 %v1600, %v1617
        %v1632 = vmul.f32 %v1601, %v1621
        %v1633 = vmul.f32 %v1602, %v1625
        %v1634 = vmul.f32 %v735, %v1613
        %v1635 = vmul.f32 %v736, %v1617
        %v1636 = vmul.f32 %v737, %v1621
        %v1637 = vmul.f32 %v738, %v1625
        %v1638 = vmul.f32 %v1603, %v1613
        %v1639 = vmul.f32 %v1604, %v1617
        %v1640 = vmul.f32 %v1605, %v1621
        %v1641 = vmul.f32 %v1606, %v1625
        %v1654 = vrot.slane %v1630, 2
        %v1655 = vrot.slane %v1634, 2
        %v1656 = vsel %vm1289, %v1654, %v1655
        %v1657 = vrot.slane %v1631, 2
        %v1658 = vrot.slane %v1635, 2
        %v1659 = vsel %vm1289, %v1657, %v1658
        %v1660 = vrot.slane %v1632, 2
        %v1661 = vrot.slane %v1636, 2
        %v1662 = vsel %vm1289, %v1660, %v1661
        %v1663 = vrot.slane %v1633, 2
        %v1664 = vrot.slane %v1637, 2
        %v1665 = vsel %vm1289, %v1663, %v1664
        %v1666 = vrot.slane %v1638, 2
        %v1667 = vsel %vm1289, %v1655, %v1666
        %v1668 = vrot.slane %v1639, 2
        %v1669 = vsel %vm1289, %v1658, %v1668
        %v1670 = vrot.slane %v1640, 2
        %v1671 = vsel %vm1289, %v1661, %v1670
        %v1672 = vrot.slane %v1641, 2
        %v1673 = vsel %vm1289, %v1664, %v1672
        %v1682 = vadd.f32 %v1591, %v1656
        %v1683 = vadd.f32 %v1592, %v1659
        %v1684 = vadd.f32 %v1593, %v1662
        %v1685 = vadd.f32 %v1594, %v1665
        %v1686 = vadd.f32 %v1595, %v1667
        %v1687 = vadd.f32 %v1596, %v1669
        %v1688 = vadd.f32 %v1597, %v1671
        %v1689 = vadd.f32 %v1598, %v1673
        %v1690 = vld [vmem:[#allocation2] sm:$0xf8]
        %v1691 = vld [vmem:[#allocation2 + $0x8] sm:$0xf8]
        %v1692 = vld [vmem:[#allocation2 + $0x10] sm:$0xf8]
        %v1693 = vld [vmem:[#allocation2 + $0x18] sm:$0xf8]
        %v1694 = vld [vmem:[#allocation2 + $0x40] sm:$0x7]
        %v1695 = vld [vmem:[#allocation2 + $0x48] sm:$0x7]
        %v1696 = vld [vmem:[#allocation2 + $0x50] sm:$0x7]
        %v1697 = vld [vmem:[#allocation2 + $0x58] sm:$0x7]
        %s1698 = scalar_lea.vmem [#allocation6], 39
        %v1699 = vld [vmem:[%s1698] ss:$8 sm:$0xf]
        %v1701 = vlaneseq
        %v1702 = vshrl.u32 %v1701, 7
        %v1703 = vsub.s32 0, %v1702
        %v1704 = vrot.slane %v1699, %v1703
        %v1705 = vlaneseq
        %v1706 = vshrl.u32 %v1705, 7
        %v1707 = vsub.s32 1, %v1706
        %v1708 = vrot.slane %v1699, %v1707
        %v1709 = vlaneseq
        %v1710 = vshrl.u32 %v1709, 7
        %v1711 = vsub.s32 2, %v1710
        %v1712 = vrot.slane %v1699, %v1711
        %v1713 = vlaneseq
        %v1714 = vshrl.u32 %v1713, 7
        %v1715 = vsub.s32 3, %v1714
        %v1716 = vrot.slane %v1699, %v1715
        %v1721 = vmul.f32 %v1690, %v1704
        %v1722 = vmul.f32 %v1691, %v1708
        %v1723 = vmul.f32 %v1692, %v1712
        %v1724 = vmul.f32 %v1693, %v1716
        %v1725 = vmul.f32 %v548, %v1704
        %v1726 = vmul.f32 %v549, %v1708
        %v1727 = vmul.f32 %v550, %v1712
        %v1728 = vmul.f32 %v551, %v1716
        %v1729 = vmul.f32 %v1694, %v1704
        %v1730 = vmul.f32 %v1695, %v1708
        %v1731 = vmul.f32 %v1696, %v1712
        %v1732 = vmul.f32 %v1697, %v1716
        %vm1745 = vcmask 1044480
        %v1746 = vrot.slane %v1721, 3
        %v1747 = vrot.slane %v1725, 3
        %v1748 = vsel %vm1745, %v1746, %v1747
        %v1749 = vrot.slane %v1722, 3
        %v1750 = vrot.slane %v1726, 3
        %v1751 = vsel %vm1745, %v1749, %v1750
        %v1752 = vrot.slane %v1723, 3
        %v1753 = vrot.slane %v1727, 3
        %v1754 = vsel %vm1745, %v1752, %v1753
        %v1755 = vrot.slane %v1724, 3
        %v1756 = vrot.slane %v1728, 3
        %v1757 = vsel %vm1745, %v1755, %v1756
        %v1758 = vrot.slane %v1729, 3
        %v1759 = vsel %vm1745, %v1747, %v1758
        %v1760 = vrot.slane %v1730, 3
        %v1761 = vsel %vm1745, %v1750, %v1760
        %v1762 = vrot.slane %v1731, 3
        %v1763 = vsel %vm1745, %v1753, %v1762
        %v1764 = vrot.slane %v1732, 3
        %v1765 = vsel %vm1745, %v1756, %v1764
        %v1774 = vadd.f32 %v1682, %v1748
        %v1775 = vadd.f32 %v1683, %v1751
        %v1776 = vadd.f32 %v1684, %v1754
        %v1777 = vadd.f32 %v1685, %v1757
        %v1778 = vadd.f32 %v1686, %v1759
        %v1779 = vadd.f32 %v1687, %v1761
        %v1780 = vadd.f32 %v1688, %v1763
        %v1781 = vadd.f32 %v1689, %v1765
        %v1782 = vld [vmem:[%s382] sm:$0xf8]
        %v1783 = vld [vmem:[%s382 + $0x8] sm:$0xf8]
        %v1784 = vld [vmem:[%s382 + $0x10] sm:$0xf8]
        %v1785 = vld [vmem:[%s382 + $0x18] sm:$0xf8]
        %v1786 = vld [vmem:[%s382 + $0x40] sm:$0x7]
        %v1787 = vld [vmem:[%s382 + $0x48] sm:$0x7]
        %v1788 = vld [vmem:[%s382 + $0x50] sm:$0x7]
        %v1789 = vld [vmem:[%s382 + $0x58] sm:$0x7]
        %s1790 = scalar_lea.vmem [#allocation6], 64
        %v1791 = vld [vmem:[%s1790] ss:$8 sm:$0xf]
        %v1793 = vlaneseq
        %v1794 = vshrl.u32 %v1793, 7
        %v1795 = vsub.s32 0, %v1794
        %v1796 = vrot.slane %v1791, %v1795
        %v1797 = vlaneseq
        %v1798 = vshrl.u32 %v1797, 7
        %v1799 = vsub.s32 1, %v1798
        %v1800 = vrot.slane %v1791, %v1799
        %v1801 = vlaneseq
        %v1802 = vshrl.u32 %v1801, 7
        %v1803 = vsub.s32 2, %v1802
        %v1804 = vrot.slane %v1791, %v1803
        %v1805 = vlaneseq
        %v1806 = vshrl.u32 %v1805, 7
        %v1807 = vsub.s32 3, %v1806
        %v1808 = vrot.slane %v1791, %v1807
        %v1813 = vmul.f32 %v1782, %v1796
        %v1814 = vmul.f32 %v1783, %v1800
        %v1815 = vmul.f32 %v1784, %v1804
        %v1816 = vmul.f32 %v1785, %v1808
        %v1817 = vmul.f32 %v594, %v1796
        %v1818 = vmul.f32 %v595, %v1800
        %v1819 = vmul.f32 %v596, %v1804
        %v1820 = vmul.f32 %v597, %v1808
        %v1821 = vmul.f32 %v1786, %v1796
        %v1822 = vmul.f32 %v1787, %v1800
        %v1823 = vmul.f32 %v1788, %v1804
        %v1824 = vmul.f32 %v1789, %v1808
        %v1837 = vrot.slane %v1813, 3
        %v1838 = vrot.slane %v1817, 3
        %v1839 = vsel %vm1745, %v1837, %v1838
        %v1840 = vrot.slane %v1814, 3
        %v1841 = vrot.slane %v1818, 3
        %v1842 = vsel %vm1745, %v1840, %v1841
        %v1843 = vrot.slane %v1815, 3
        %v1844 = vrot.slane %v1819, 3
        %v1845 = vsel %vm1745, %v1843, %v1844
        %v1846 = vrot.slane %v1816, 3
        %v1847 = vrot.slane %v1820, 3
        %v1848 = vsel %vm1745, %v1846, %v1847
        %v1849 = vrot.slane %v1821, 3
        %v1850 = vsel %vm1745, %v1838, %v1849
        %v1851 = vrot.slane %v1822, 3
        %v1852 = vsel %vm1745, %v1841, %v1851
        %v1853 = vrot.slane %v1823, 3
        %v1854 = vsel %vm1745, %v1844, %v1853
        %v1855 = vrot.slane %v1824, 3
        %v1856 = vsel %vm1745, %v1847, %v1855
        %v1865 = vadd.f32 %v1774, %v1839
        %v1866 = vadd.f32 %v1775, %v1842
        %v1867 = vadd.f32 %v1776, %v1845
        %v1868 = vadd.f32 %v1777, %v1848
        %v1869 = vadd.f32 %v1778, %v1850
        %v1870 = vadd.f32 %v1779, %v1852
        %v1871 = vadd.f32 %v1780, %v1854
        %v1872 = vadd.f32 %v1781, %v1856
        %v1873 = vld [vmem:[%s427] sm:$0xf8]
        %v1874 = vld [vmem:[%s427 + $0x8] sm:$0xf8]
        %v1875 = vld [vmem:[%s427 + $0x10] sm:$0xf8]
        %v1876 = vld [vmem:[%s427 + $0x18] sm:$0xf8]
        %v1877 = vld [vmem:[%s427 + $0x40] sm:$0x7]
        %v1878 = vld [vmem:[%s427 + $0x48] sm:$0x7]
        %v1879 = vld [vmem:[%s427 + $0x50] sm:$0x7]
        %v1880 = vld [vmem:[%s427 + $0x58] sm:$0x7]
        %s1881 = scalar_lea.vmem [#allocation6], 65
        %v1882 = vld [vmem:[%s1881] ss:$8 sm:$0xf]
        %v1884 = vlaneseq
        %v1885 = vshrl.u32 %v1884, 7
        %v1886 = vsub.s32 0, %v1885
        %v1887 = vrot.slane %v1882, %v1886
        %v1888 = vlaneseq
        %v1889 = vshrl.u32 %v1888, 7
        %v1890 = vsub.s32 1, %v1889
        %v1891 = vrot.slane %v1882, %v1890
        %v1892 = vlaneseq
        %v1893 = vshrl.u32 %v1892, 7
        %v1894 = vsub.s32 2, %v1893
        %v1895 = vrot.slane %v1882, %v1894
        %v1896 = vlaneseq
        %v1897 = vshrl.u32 %v1896, 7
        %v1898 = vsub.s32 3, %v1897
        %v1899 = vrot.slane %v1882, %v1898
        %v1904 = vmul.f32 %v1873, %v1887
        %v1905 = vmul.f32 %v1874, %v1891
        %v1906 = vmul.f32 %v1875, %v1895
        %v1907 = vmul.f32 %v1876, %v1899
        %v1908 = vmul.f32 %v641, %v1887
        %v1909 = vmul.f32 %v642, %v1891
        %v1910 = vmul.f32 %v643, %v1895
        %v1911 = vmul.f32 %v644, %v1899
        %v1912 = vmul.f32 %v1877, %v1887
        %v1913 = vmul.f32 %v1878, %v1891
        %v1914 = vmul.f32 %v1879, %v1895
        %v1915 = vmul.f32 %v1880, %v1899
        %v1928 = vrot.slane %v1904, 3
        %v1929 = vrot.slane %v1908, 3
        %v1930 = vsel %vm1745, %v1928, %v1929
        %v1931 = vrot.slane %v1905, 3
        %v1932 = vrot.slane %v1909, 3
        %v1933 = vsel %vm1745, %v1931, %v1932
        %v1934 = vrot.slane %v1906, 3
        %v1935 = vrot.slane %v1910, 3
        %v1936 = vsel %vm1745, %v1934, %v1935
        %v1937 = vrot.slane %v1907, 3
        %v1938 = vrot.slane %v1911, 3
        %v1939 = vsel %vm1745, %v1937, %v1938
        %v1940 = vrot.slane %v1912, 3
        %v1941 = vsel %vm1745, %v1929, %v1940
        %v1942 = vrot.slane %v1913, 3
        %v1943 = vsel %vm1745, %v1932, %v1942
        %v1944 = vrot.slane %v1914, 3
        %v1945 = vsel %vm1745, %v1935, %v1944
        %v1946 = vrot.slane %v1915, 3
        %v1947 = vsel %vm1745, %v1938, %v1946
        %v1956 = vadd.f32 %v1865, %v1930
        %v1957 = vadd.f32 %v1866, %v1933
        %v1958 = vadd.f32 %v1867, %v1936
        %v1959 = vadd.f32 %v1868, %v1939
        %v1960 = vadd.f32 %v1869, %v1941
        %v1961 = vadd.f32 %v1870, %v1943
        %v1962 = vadd.f32 %v1871, %v1945
        %v1963 = vadd.f32 %v1872, %v1947
        %v1964 = vld [vmem:[%s497] sm:$0xf8]
        %v1965 = vld [vmem:[%s497 + $0x8] sm:$0xf8]
        %v1966 = vld [vmem:[%s497 + $0x10] sm:$0xf8]
        %v1967 = vld [vmem:[%s497 + $0x18] sm:$0xf8]
        %v1968 = vld [vmem:[%s497 + $0x40] sm:$0x7]
        %v1969 = vld [vmem:[%s497 + $0x48] sm:$0x7]
        %v1970 = vld [vmem:[%s497 + $0x50] sm:$0x7]
        %v1971 = vld [vmem:[%s497 + $0x58] sm:$0x7]
        %s1972 = scalar_lea.vmem [#allocation6], 66
        %v1973 = vld [vmem:[%s1972] ss:$8 sm:$0xf]
        %v1975 = vlaneseq
        %v1976 = vshrl.u32 %v1975, 7
        %v1977 = vsub.s32 0, %v1976
        %v1978 = vrot.slane %v1973, %v1977
        %v1979 = vlaneseq
        %v1980 = vshrl.u32 %v1979, 7
        %v1981 = vsub.s32 1, %v1980
        %v1982 = vrot.slane %v1973, %v1981
        %v1983 = vlaneseq
        %v1984 = vshrl.u32 %v1983, 7
        %v1985 = vsub.s32 2, %v1984
        %v1986 = vrot.slane %v1973, %v1985
        %v1987 = vlaneseq
        %v1988 = vshrl.u32 %v1987, 7
        %v1989 = vsub.s32 3, %v1988
        %v1990 = vrot.slane %v1973, %v1989
        %v1995 = vmul.f32 %v1964, %v1978
        %v1996 = vmul.f32 %v1965, %v1982
        %v1997 = vmul.f32 %v1966, %v1986
        %v1998 = vmul.f32 %v1967, %v1990
        %v1999 = vmul.f32 %v688, %v1978
        %v2000 = vmul.f32 %v689, %v1982
        %v2001 = vmul.f32 %v690, %v1986
        %v2002 = vmul.f32 %v691, %v1990
        %v2003 = vmul.f32 %v1968, %v1978
        %v2004 = vmul.f32 %v1969, %v1982
        %v2005 = vmul.f32 %v1970, %v1986
        %v2006 = vmul.f32 %v1971, %v1990
        %v2019 = vrot.slane %v1995, 3
        %v2020 = vrot.slane %v1999, 3
        %v2021 = vsel %vm1745, %v2019, %v2020
        %v2022 = vrot.slane %v1996, 3
        %v2023 = vrot.slane %v2000, 3
        %v2024 = vsel %vm1745, %v2022, %v2023
        %v2025 = vrot.slane %v1997, 3
        %v2026 = vrot.slane %v2001, 3
        %v2027 = vsel %vm1745, %v2025, %v2026
        %v2028 = vrot.slane %v1998, 3
        %v2029 = vrot.slane %v2002, 3
        %v2030 = vsel %vm1745, %v2028, %v2029
        %v2031 = vrot.slane %v2003, 3
        %v2032 = vsel %vm1745, %v2020, %v2031
        %v2033 = vrot.slane %v2004, 3
        %v2034 = vsel %vm1745, %v2023, %v2033
        %v2035 = vrot.slane %v2005, 3
        %v2036 = vsel %vm1745, %v2026, %v2035
        %v2037 = vrot.slane %v2006, 3
        %v2038 = vsel %vm1745, %v2029, %v2037
        %v2047 = vadd.f32 %v1956, %v2021
        %v2048 = vadd.f32 %v1957, %v2024
        %v2049 = vadd.f32 %v1958, %v2027
        %v2050 = vadd.f32 %v1959, %v2030
        %v2051 = vadd.f32 %v1960, %v2032
        %v2052 = vadd.f32 %v1961, %v2034
        %v2053 = vadd.f32 %v1962, %v2036
        %v2054 = vadd.f32 %v1963, %v2038
        %v2055 = vld [vmem:[%s510] sm:$0xf8]
        %v2056 = vld [vmem:[%s510 + $0x8] sm:$0xf8]
        %v2057 = vld [vmem:[%s510 + $0x10] sm:$0xf8]
        %v2058 = vld [vmem:[%s510 + $0x18] sm:$0xf8]
        %v2059 = vld [vmem:[%s510 + $0x40] sm:$0x7]
        %v2060 = vld [vmem:[%s510 + $0x48] sm:$0x7]
        %v2061 = vld [vmem:[%s510 + $0x50] sm:$0x7]
        %v2062 = vld [vmem:[%s510 + $0x58] sm:$0x7]
        %s2063 = scalar_lea.vmem [#allocation6], 67
        %v2064 = vld [vmem:[%s2063] ss:$8 sm:$0xf]
        %v2066 = vlaneseq
        %v2067 = vshrl.u32 %v2066, 7
        %v2068 = vsub.s32 0, %v2067
        %v2069 = vrot.slane %v2064, %v2068
        %v2070 = vlaneseq
        %v2071 = vshrl.u32 %v2070, 7
        %v2072 = vsub.s32 1, %v2071
        %v2073 = vrot.slane %v2064, %v2072
        %v2074 = vlaneseq
        %v2075 = vshrl.u32 %v2074, 7
        %v2076 = vsub.s32 2, %v2075
        %v2077 = vrot.slane %v2064, %v2076
        %v2078 = vlaneseq
        %v2079 = vshrl.u32 %v2078, 7
        %v2080 = vsub.s32 3, %v2079
        %v2081 = vrot.slane %v2064, %v2080
        %v2086 = vmul.f32 %v2055, %v2069
        %v2087 = vmul.f32 %v2056, %v2073
        %v2088 = vmul.f32 %v2057, %v2077
        %v2089 = vmul.f32 %v2058, %v2081
        %v2090 = vmul.f32 %v735, %v2069
        %v2091 = vmul.f32 %v736, %v2073
        %v2092 = vmul.f32 %v737, %v2077
        %v2093 = vmul.f32 %v738, %v2081
        %v2094 = vmul.f32 %v2059, %v2069
        %v2095 = vmul.f32 %v2060, %v2073
        %v2096 = vmul.f32 %v2061, %v2077
        %v2097 = vmul.f32 %v2062, %v2081
        %v2110 = vrot.slane %v2086, 3
        %v2111 = vrot.slane %v2090, 3
        %v2112 = vsel %vm1745, %v2110, %v2111
        %v2113 = vrot.slane %v2087, 3
        %v2114 = vrot.slane %v2091, 3
        %v2115 = vsel %vm1745, %v2113, %v2114
        %v2116 = vrot.slane %v2088, 3
        %v2117 = vrot.slane %v2092, 3
        %v2118 = vsel %vm1745, %v2116, %v2117
        %v2119 = vrot.slane %v2089, 3
        %v2120 = vrot.slane %v2093, 3
        %v2121 = vsel %vm1745, %v2119, %v2120
        %v2122 = vrot.slane %v2094, 3
        %v2123 = vsel %vm1745, %v2111, %v2122
        %v2124 = vrot.slane %v2095, 3
        %v2125 = vsel %vm1745, %v2114, %v2124
        %v2126 = vrot.slane %v2096, 3
        %v2127 = vsel %vm1745, %v2117, %v2126
        %v2128 = vrot.slane %v2097, 3
        %v2129 = vsel %vm1745, %v2120, %v2128
        %v2138 = vadd.f32 %v2047, %v2112
        %v2139 = vadd.f32 %v2048, %v2115
        %v2140 = vadd.f32 %v2049, %v2118
        %v2141 = vadd.f32 %v2050, %v2121
        %v2142 = vadd.f32 %v2051, %v2123
        %v2143 = vadd.f32 %v2052, %v2125
        %v2144 = vadd.f32 %v2053, %v2127
        %v2145 = vadd.f32 %v2054, %v2129
        %v2146 = vld [vmem:[#allocation2] sm:$0xf0]
        %v2147 = vld [vmem:[#allocation2 + $0x8] sm:$0xf0]
        %v2148 = vld [vmem:[#allocation2 + $0x10] sm:$0xf0]
        %v2149 = vld [vmem:[#allocation2 + $0x18] sm:$0xf0]
        %v2150 = vld [vmem:[#allocation2 + $0x40] sm:$0xf]
        %v2151 = vld [vmem:[#allocation2 + $0x48] sm:$0xf]
        %v2152 = vld [vmem:[#allocation2 + $0x50] sm:$0xf]
        %v2153 = vld [vmem:[#allocation2 + $0x58] sm:$0xf]
        %s2154 = scalar_lea.vmem [#allocation6], 68
        %v2155 = vld [vmem:[%s2154] ss:$8 sm:$0xf]
        %v2157 = vlaneseq
        %v2158 = vshrl.u32 %v2157, 7
        %v2159 = vsub.s32 0, %v2158
        %v2160 = vrot.slane %v2155, %v2159
        %v2161 = vlaneseq
        %v2162 = vshrl.u32 %v2161, 7
        %v2163 = vsub.s32 1, %v2162
        %v2164 = vrot.slane %v2155, %v2163
        %v2165 = vlaneseq
        %v2166 = vshrl.u32 %v2165, 7
        %v2167 = vsub.s32 2, %v2166
        %v2168 = vrot.slane %v2155, %v2167
        %v2169 = vlaneseq
        %v2170 = vshrl.u32 %v2169, 7
        %v2171 = vsub.s32 3, %v2170
        %v2172 = vrot.slane %v2155, %v2171
        %v2177 = vmul.f32 %v2146, %v2160
        %v2178 = vmul.f32 %v2147, %v2164
        %v2179 = vmul.f32 %v2148, %v2168
        %v2180 = vmul.f32 %v2149, %v2172
        %v2181 = vmul.f32 %v548, %v2160
        %v2182 = vmul.f32 %v549, %v2164
        %v2183 = vmul.f32 %v550, %v2168
        %v2184 = vmul.f32 %v551, %v2172
        %v2185 = vmul.f32 %v2150, %v2160
        %v2186 = vmul.f32 %v2151, %v2164
        %v2187 = vmul.f32 %v2152, %v2168
        %v2188 = vmul.f32 %v2153, %v2172
        %vm2201 = vcmask 1043456
        %v2202 = vrot.slane %v2177, 4
        %v2203 = vrot.slane %v2181, 4
        %v2204 = vsel %vm2201, %v2202, %v2203
        %v2205 = vrot.slane %v2178, 4
        %v2206 = vrot.slane %v2182, 4
        %v2207 = vsel %vm2201, %v2205, %v2206
        %v2208 = vrot.slane %v2179, 4
        %v2209 = vrot.slane %v2183, 4
        %v2210 = vsel %vm2201, %v2208, %v2209
        %v2211 = vrot.slane %v2180, 4
        %v2212 = vrot.slane %v2184, 4
        %v2213 = vsel %vm2201, %v2211, %v2212
        %v2214 = vrot.slane %v2185, 4
        %v2215 = vsel %vm2201, %v2203, %v2214
        %v2216 = vrot.slane %v2186, 4
        %v2217 = vsel %vm2201, %v2206, %v2216
        %v2218 = vrot.slane %v2187, 4
        %v2219 = vsel %vm2201, %v2209, %v2218
        %v2220 = vrot.slane %v2188, 4
        %v2221 = vsel %vm2201, %v2212, %v2220
        %v2230 = vadd.f32 %v2138, %v2204
        %v2231 = vadd.f32 %v2139, %v2207
        %v2232 = vadd.f32 %v2140, %v2210
        %v2233 = vadd.f32 %v2141, %v2213
        %v2234 = vadd.f32 %v2142, %v2215
        %v2235 = vadd.f32 %v2143, %v2217
        %v2236 = vadd.f32 %v2144, %v2219
        %v2237 = vadd.f32 %v2145, %v2221
        %v2238 = vld [vmem:[%s382] sm:$0xf0]
        %v2239 = vld [vmem:[%s382 + $0x8] sm:$0xf0]
        %v2240 = vld [vmem:[%s382 + $0x10] sm:$0xf0]
        %v2241 = vld [vmem:[%s382 + $0x18] sm:$0xf0]
        %v2242 = vld [vmem:[%s382 + $0x40] sm:$0xf]
        %v2243 = vld [vmem:[%s382 + $0x48] sm:$0xf]
        %v2244 = vld [vmem:[%s382 + $0x50] sm:$0xf]
        %v2245 = vld [vmem:[%s382 + $0x58] sm:$0xf]
        %s2246 = scalar_lea.vmem [#allocation6], 69
        %v2247 = vld [vmem:[%s2246] ss:$8 sm:$0xf]
        %v2249 = vlaneseq
        %v2250 = vshrl.u32 %v2249, 7
        %v2251 = vsub.s32 0, %v2250
        %v2252 = vrot.slane %v2247, %v2251
        %v2253 = vlaneseq
        %v2254 = vshrl.u32 %v2253, 7
        %v2255 = vsub.s32 1, %v2254
        %v2256 = vrot.slane %v2247, %v2255
        %v2257 = vlaneseq
        %v2258 = vshrl.u32 %v2257, 7
        %v2259 = vsub.s32 2, %v2258
        %v2260 = vrot.slane %v2247, %v2259
        %v2261 = vlaneseq
        %v2262 = vshrl.u32 %v2261, 7
        %v2263 = vsub.s32 3, %v2262
        %v2264 = vrot.slane %v2247, %v2263
        %v2269 = vmul.f32 %v2238, %v2252
        %v2270 = vmul.f32 %v2239, %v2256
        %v2271 = vmul.f32 %v2240, %v2260
        %v2272 = vmul.f32 %v2241, %v2264
        %v2273 = vmul.f32 %v594, %v2252
        %v2274 = vmul.f32 %v595, %v2256
        %v2275 = vmul.f32 %v596, %v2260
        %v2276 = vmul.f32 %v597, %v2264
        %v2277 = vmul.f32 %v2242, %v2252
        %v2278 = vmul.f32 %v2243, %v2256
        %v2279 = vmul.f32 %v2244, %v2260
        %v2280 = vmul.f32 %v2245, %v2264
        %v2293 = vrot.slane %v2269, 4
        %v2294 = vrot.slane %v2273, 4
        %v2295 = vsel %vm2201, %v2293, %v2294
        %v2296 = vrot.slane %v2270, 4
        %v2297 = vrot.slane %v2274, 4
        %v2298 = vsel %vm2201, %v2296, %v2297
        %v2299 = vrot.slane %v2271, 4
        %v2300 = vrot.slane %v2275, 4
        %v2301 = vsel %vm2201, %v2299, %v2300
        %v2302 = vrot.slane %v2272, 4
        %v2303 = vrot.slane %v2276, 4
        %v2304 = vsel %vm2201, %v2302, %v2303
        %v2305 = vrot.slane %v2277, 4
        %v2306 = vsel %vm2201, %v2294, %v2305
        %v2307 = vrot.slane %v2278, 4
        %v2308 = vsel %vm2201, %v2297, %v2307
        %v2309 = vrot.slane %v2279, 4
        %v2310 = vsel %vm2201, %v2300, %v2309
        %v2311 = vrot.slane %v2280, 4
        %v2312 = vsel %vm2201, %v2303, %v2311
        %v2321 = vadd.f32 %v2230, %v2295
        %v2322 = vadd.f32 %v2231, %v2298
        %v2323 = vadd.f32 %v2232, %v2301
        %v2324 = vadd.f32 %v2233, %v2304
        %v2325 = vadd.f32 %v2234, %v2306
        %v2326 = vadd.f32 %v2235, %v2308
        %v2327 = vadd.f32 %v2236, %v2310
        %v2328 = vadd.f32 %v2237, %v2312
        %v2329 = vld [vmem:[%s427] sm:$0xf0]
        %v2330 = vld [vmem:[%s427 + $0x8] sm:$0xf0]
        %v2331 = vld [vmem:[%s427 + $0x10] sm:$0xf0]
        %v2332 = vld [vmem:[%s427 + $0x18] sm:$0xf0]
        %v2333 = vld [vmem:[%s427 + $0x40] sm:$0xf]
        %v2334 = vld [vmem:[%s427 + $0x48] sm:$0xf]
        %v2335 = vld [vmem:[%s427 + $0x50] sm:$0xf]
        %v2336 = vld [vmem:[%s427 + $0x58] sm:$0xf]
        %s2337 = scalar_lea.vmem [#allocation6], 70
        %v2338 = vld [vmem:[%s2337] ss:$8 sm:$0xf]
        %v2340 = vlaneseq
        %v2341 = vshrl.u32 %v2340, 7
        %v2342 = vsub.s32 0, %v2341
        %v2343 = vrot.slane %v2338, %v2342
        %v2344 = vlaneseq
        %v2345 = vshrl.u32 %v2344, 7
        %v2346 = vsub.s32 1, %v2345
        %v2347 = vrot.slane %v2338, %v2346
        %v2348 = vlaneseq
        %v2349 = vshrl.u32 %v2348, 7
        %v2350 = vsub.s32 2, %v2349
        %v2351 = vrot.slane %v2338, %v2350
        %v2352 = vlaneseq
        %v2353 = vshrl.u32 %v2352, 7
        %v2354 = vsub.s32 3, %v2353
        %v2355 = vrot.slane %v2338, %v2354
        %v2360 = vmul.f32 %v2329, %v2343
        %v2361 = vmul.f32 %v2330, %v2347
        %v2362 = vmul.f32 %v2331, %v2351
        %v2363 = vmul.f32 %v2332, %v2355
        %v2364 = vmul.f32 %v641, %v2343
        %v2365 = vmul.f32 %v642, %v2347
        %v2366 = vmul.f32 %v643, %v2351
        %v2367 = vmul.f32 %v644, %v2355
        %v2368 = vmul.f32 %v2333, %v2343
        %v2369 = vmul.f32 %v2334, %v2347
        %v2370 = vmul.f32 %v2335, %v2351
        %v2371 = vmul.f32 %v2336, %v2355
        %v2384 = vrot.slane %v2360, 4
        %v2385 = vrot.slane %v2364, 4
        %v2386 = vsel %vm2201, %v2384, %v2385
        %v2387 = vrot.slane %v2361, 4
        %v2388 = vrot.slane %v2365, 4
        %v2389 = vsel %vm2201, %v2387, %v2388
        %v2390 = vrot.slane %v2362, 4
        %v2391 = vrot.slane %v2366, 4
        %v2392 = vsel %vm2201, %v2390, %v2391
        %v2393 = vrot.slane %v2363, 4
        %v2394 = vrot.slane %v2367, 4
        %v2395 = vsel %vm2201, %v2393, %v2394
        %v2396 = vrot.slane %v2368, 4
        %v2397 = vsel %vm2201, %v2385, %v2396
        %v2398 = vrot.slane %v2369, 4
        %v2399 = vsel %vm2201, %v2388, %v2398
        %v2400 = vrot.slane %v2370, 4
        %v2401 = vsel %vm2201, %v2391, %v2400
        %v2402 = vrot.slane %v2371, 4
        %v2403 = vsel %vm2201, %v2394, %v2402
        %v2412 = vadd.f32 %v2321, %v2386
        %v2413 = vadd.f32 %v2322, %v2389
        %v2414 = vadd.f32 %v2323, %v2392
        %v2415 = vadd.f32 %v2324, %v2395
        %v2416 = vadd.f32 %v2325, %v2397
        %v2417 = vadd.f32 %v2326, %v2399
        %v2418 = vadd.f32 %v2327, %v2401
        %v2419 = vadd.f32 %v2328, %v2403
        %v2420 = vld [vmem:[%s497] sm:$0xf0]
        %v2421 = vld [vmem:[%s497 + $0x8] sm:$0xf0]
        %v2422 = vld [vmem:[%s497 + $0x10] sm:$0xf0]
        %v2423 = vld [vmem:[%s497 + $0x18] sm:$0xf0]
        %v2424 = vld [vmem:[%s497 + $0x40] sm:$0xf]
        %v2425 = vld [vmem:[%s497 + $0x48] sm:$0xf]
        %v2426 = vld [vmem:[%s497 + $0x50] sm:$0xf]
        %v2427 = vld [vmem:[%s497 + $0x58] sm:$0xf]
        %s2428 = scalar_lea.vmem [#allocation6], 71
        %v2429 = vld [vmem:[%s2428] ss:$8 sm:$0xf]
        %v2431 = vlaneseq
        %v2432 = vshrl.u32 %v2431, 7
        %v2433 = vsub.s32 0, %v2432
        %v2434 = vrot.slane %v2429, %v2433
        %v2435 = vlaneseq
        %v2436 = vshrl.u32 %v2435, 7
        %v2437 = vsub.s32 1, %v2436
        %v2438 = vrot.slane %v2429, %v2437
        %v2439 = vlaneseq
        %v2440 = vshrl.u32 %v2439, 7
        %v2441 = vsub.s32 2, %v2440
        %v2442 = vrot.slane %v2429, %v2441
        %v2443 = vlaneseq
        %v2444 = vshrl.u32 %v2443, 7
        %v2445 = vsub.s32 3, %v2444
        %v2446 = vrot.slane %v2429, %v2445
        %v2451 = vmul.f32 %v2420, %v2434
        %v2452 = vmul.f32 %v2421, %v2438
        %v2453 = vmul.f32 %v2422, %v2442
        %v2454 = vmul.f32 %v2423, %v2446
        %v2455 = vmul.f32 %v688, %v2434
        %v2456 = vmul.f32 %v689, %v2438
        %v2457 = vmul.f32 %v690, %v2442
        %v2458 = vmul.f32 %v691, %v2446
        %v2459 = vmul.f32 %v2424, %v2434
        %v2460 = vmul.f32 %v2425, %v2438
        %v2461 = vmul.f32 %v2426, %v2442
        %v2462 = vmul.f32 %v2427, %v2446
        %v2475 = vrot.slane %v2451, 4
        %v2476 = vrot.slane %v2455, 4
        %v2477 = vsel %vm2201, %v2475, %v2476
        %v2478 = vrot.slane %v2452, 4
        %v2479 = vrot.slane %v2456, 4
        %v2480 = vsel %vm2201, %v2478, %v2479
        %v2481 = vrot.slane %v2453, 4
        %v2482 = vrot.slane %v2457, 4
        %v2483 = vsel %vm2201, %v2481, %v2482
        %v2484 = vrot.slane %v2454, 4
        %v2485 = vrot.slane %v2458, 4
        %v2486 = vsel %vm2201, %v2484, %v2485
        %v2487 = vrot.slane %v2459, 4
        %v2488 = vsel %vm2201, %v2476, %v2487
        %v2489 = vrot.slane %v2460, 4
        %v2490 = vsel %vm2201, %v2479, %v2489
        %v2491 = vrot.slane %v2461, 4
        %v2492 = vsel %vm2201, %v2482, %v2491
        %v2493 = vrot.slane %v2462, 4
        %v2494 = vsel %vm2201, %v2485, %v2493
        %v2503 = vadd.f32 %v2412, %v2477
        %v2504 = vadd.f32 %v2413, %v2480
        %v2505 = vadd.f32 %v2414, %v2483
        %v2506 = vadd.f32 %v2415, %v2486
        %v2507 = vadd.f32 %v2416, %v2488
        %v2508 = vadd.f32 %v2417, %v2490
        %v2509 = vadd.f32 %v2418, %v2492
        %v2510 = vadd.f32 %v2419, %v2494
        %v2511 = vld [vmem:[%s510] sm:$0xf0]
        %v2512 = vld [vmem:[%s510 + $0x8] sm:$0xf0]
        %v2513 = vld [vmem:[%s510 + $0x10] sm:$0xf0]
        %v2514 = vld [vmem:[%s510 + $0x18] sm:$0xf0]
        %v2515 = vld [vmem:[%s510 + $0x40] sm:$0xf]
        %v2516 = vld [vmem:[%s510 + $0x48] sm:$0xf]
        %v2517 = vld [vmem:[%s510 + $0x50] sm:$0xf]
        %v2518 = vld [vmem:[%s510 + $0x58] sm:$0xf]
        %s2519 = scalar_lea.vmem [#allocation6], 96
        %v2520 = vld [vmem:[%s2519] ss:$8 sm:$0xf]
        %v2522 = vlaneseq
        %v2523 = vshrl.u32 %v2522, 7
        %v2524 = vsub.s32 0, %v2523
        %v2525 = vrot.slane %v2520, %v2524
        %v2526 = vlaneseq
        %v2527 = vshrl.u32 %v2526, 7
        %v2528 = vsub.s32 1, %v2527
        %v2529 = vrot.slane %v2520, %v2528
        %v2530 = vlaneseq
        %v2531 = vshrl.u32 %v2530, 7
        %v2532 = vsub.s32 2, %v2531
        %v2533 = vrot.slane %v2520, %v2532
        %v2534 = vlaneseq
        %v2535 = vshrl.u32 %v2534, 7
        %v2536 = vsub.s32 3, %v2535
        %v2537 = vrot.slane %v2520, %v2536
        %v2542 = vmul.f32 %v2511, %v2525
        %v2543 = vmul.f32 %v2512, %v2529
        %v2544 = vmul.f32 %v2513, %v2533
        %v2545 = vmul.f32 %v2514, %v2537
        %v2546 = vmul.f32 %v735, %v2525
        %v2547 = vmul.f32 %v736, %v2529
        %v2548 = vmul.f32 %v737, %v2533
        %v2549 = vmul.f32 %v738, %v2537
        %v2550 = vmul.f32 %v2515, %v2525
        %v2551 = vmul.f32 %v2516, %v2529
        %v2552 = vmul.f32 %v2517, %v2533
        %v2553 = vmul.f32 %v2518, %v2537
        %v2566 = vrot.slane %v2542, 4
        %v2567 = vrot.slane %v2546, 4
        %v2568 = vsel %vm2201, %v2566, %v2567
        %v2569 = vrot.slane %v2543, 4
        %v2570 = vrot.slane %v2547, 4
        %v2571 = vsel %vm2201, %v2569, %v2570
        %v2572 = vrot.slane %v2544, 4
        %v2573 = vrot.slane %v2548, 4
        %v2574 = vsel %vm2201, %v2572, %v2573
        %v2575 = vrot.slane %v2545, 4
        %v2576 = vrot.slane %v2549, 4
        %v2577 = vsel %vm2201, %v2575, %v2576
        %v2578 = vrot.slane %v2550, 4
        %v2579 = vsel %vm2201, %v2567, %v2578
        %v2580 = vrot.slane %v2551, 4
        %v2581 = vsel %vm2201, %v2570, %v2580
        %v2582 = vrot.slane %v2552, 4
        %v2583 = vsel %vm2201, %v2573, %v2582
        %v2584 = vrot.slane %v2553, 4
        %v2585 = vsel %vm2201, %v2576, %v2584
        %v2594 = vadd.f32 %v2503, %v2568
        %v2595 = vadd.f32 %v2504, %v2571
        %v2596 = vadd.f32 %v2505, %v2574
        %v2597 = vadd.f32 %v2506, %v2577
        %v2598 = vadd.f32 %v2507, %v2579
        %v2599 = vadd.f32 %v2508, %v2581
        %v2600 = vadd.f32 %v2509, %v2583
        %v2601 = vadd.f32 %v2510, %v2585
        %v2602 = vmul.f32 %v2594, 0.70710677
        %v2603 = vmul.f32 %v2595, 0.70710677
        %v2604 = vmul.f32 %v2596, 0.70710677
        %v2605 = vmul.f32 %v2597, 0.70710677
        %v2606 = vmul.f32 %v2598, 0.70710677
        %v2607 = vmul.f32 %v2599, 0.70710677
        %v2608 = vmul.f32 %v2600, 0.70710677
        %v2609 = vmul.f32 %v2601, 0.70710677
        %v2610 = vand.u32 2147483647, %v2602
        %v2611 = vand.u32 2147483647, %v2603
        %v2612 = vand.u32 2147483647, %v2604
        %v2613 = vand.u32 2147483647, %v2605
        %v2614 = vand.u32 2147483647, %v2606
        %v2615 = vand.u32 2147483647, %v2607
        %v2616 = vand.u32 2147483647, %v2608
        %v2617 = vand.u32 2147483647, %v2609
        %v2618 = vmul.f32 %v2610, 0.3275911
        %v2619 = vmul.f32 %v2611, 0.3275911
        %v2620 = vmul.f32 %v2612, 0.3275911
        %v2621 = vmul.f32 %v2613, 0.3275911
        %v2622 = vmul.f32 %v2614, 0.3275911
        %v2623 = vmul.f32 %v2615, 0.3275911
        %v2624 = vmul.f32 %v2616, 0.3275911
        %v2625 = vmul.f32 %v2617, 0.3275911
        %v2626 = vadd.f32 %v2618, 1.0
        %v2627 = vadd.f32 %v2619, 1.0
        %v2628 = vadd.f32 %v2620, 1.0
        %v2629 = vadd.f32 %v2621, 1.0
        %v2630 = vadd.f32 %v2622, 1.0
        %v2631 = vadd.f32 %v2623, 1.0
        %v2632 = vadd.f32 %v2624, 1.0
        %v2633 = vadd.f32 %v2625, 1.0
        %v2634 = vrcp.pop %v2626
        %v2635 = vmul.f32 1.0, %v2634
        %v2636 = vrcp.pop %v2627
        %v2637 = vmul.f32 1.0, %v2636
        %v2638 = vrcp.pop %v2628
        %v2639 = vmul.f32 1.0, %v2638
        %v2640 = vrcp.pop %v2629
        %v2641 = vmul.f32 1.0, %v2640
        %v2642 = vrcp.pop %v2630
        %v2643 = vmul.f32 1.0, %v2642
        %v2644 = vrcp.pop %v2631
        %v2645 = vmul.f32 1.0, %v2644
        %v2646 = vrcp.pop %v2632
        %v2647 = vmul.f32 1.0, %v2646
        %v2648 = vrcp.pop %v2633
        %v2649 = vmul.f32 1.0, %v2648
        %v2650 = vmul.f32 %v2635, 1.0614054
        %v2651 = vmul.f32 %v2637, 1.0614054
        %v2652 = vmul.f32 %v2639, 1.0614054
        %v2653 = vmul.f32 %v2641, 1.0614054
        %v2654 = vmul.f32 %v2643, 1.0614054
        %v2655 = vmul.f32 %v2645, 1.0614054
        %v2656 = vmul.f32 %v2647, 1.0614054
        %v2657 = vmul.f32 %v2649, 1.0614054
        %v2658 = vadd.f32 %v2650, -1.4531521
        %v2659 = vadd.f32 %v2651, -1.4531521
        %v2660 = vadd.f32 %v2652, -1.4531521
        %v2661 = vadd.f32 %v2653, -1.4531521
        %v2662 = vadd.f32 %v2654, -1.4531521
        %v2663 = vadd.f32 %v2655, -1.4531521
        %v2664 = vadd.f32 %v2656, -1.4531521
        %v2665 = vadd.f32 %v2657, -1.4531521
        %v2666 = vmul.f32 %v2635, %v2658
        %v2667 = vmul.f32 %v2637, %v2659
        %v2668 = vmul.f32 %v2639, %v2660
        %v2669 = vmul.f32 %v2641, %v2661
        %v2670 = vmul.f32 %v2643, %v2662
        %v2671 = vmul.f32 %v2645, %v2663
        %v2672 = vmul.f32 %v2647, %v2664
        %v2673 = vmul.f32 %v2649, %v2665
        %v2674 = vadd.f32 %v2666, 1.4214138
        %v2675 = vadd.f32 %v2667, 1.4214138
        %v2676 = vadd.f32 %v2668, 1.4214138
        %v2677 = vadd.f32 %v2669, 1.4214138
        %v2678 = vadd.f32 %v2670, 1.4214138
        %v2679 = vadd.f32 %v2671, 1.4214138
        %v2680 = vadd.f32 %v2672, 1.4214138
        %v2681 = vadd.f32 %v2673, 1.4214138
        %v2682 = vmul.f32 %v2635, %v2674
        %v2683 = vmul.f32 %v2637, %v2675
        %v2684 = vmul.f32 %v2639, %v2676
        %v2685 = vmul.f32 %v2641, %v2677
        %v2686 = vmul.f32 %v2643, %v2678
        %v2687 = vmul.f32 %v2645, %v2679
        %v2688 = vmul.f32 %v2647, %v2680
        %v2689 = vmul.f32 %v2649, %v2681
        %v2690 = vadd.f32 %v2682, -0.28449672
        %v2691 = vadd.f32 %v2683, -0.28449672
        %v2692 = vadd.f32 %v2684, -0.28449672
        %v2693 = vadd.f32 %v2685, -0.28449672
        %v2694 = vadd.f32 %v2686, -0.28449672
        %v2695 = vadd.f32 %v2687, -0.28449672
        %v2696 = vadd.f32 %v2688, -0.28449672
        %v2697 = vadd.f32 %v2689, -0.28449672
        %v2698 = vmul.f32 %v2635, %v2690
        %v2699 = vmul.f32 %v2637, %v2691
        %v2700 = vmul.f32 %v2639, %v2692
        %v2701 = vmul.f32 %v2641, %v2693
        %v2702 = vmul.f32 %v2643, %v2694
        %v2703 = vmul.f32 %v2645, %v2695
        %v2704 = vmul.f32 %v2647, %v2696
        %v2705 = vmul.f32 %v2649, %v2697
        %v2706 = vadd.f32 %v2698, 0.2548296
        %v2707 = vadd.f32 %v2699, 0.2548296
        %v2708 = vadd.f32 %v2700, 0.2548296
        %v2709 = vadd.f32 %v2701, 0.2548296
        %v2710 = vadd.f32 %v2702, 0.2548296
        %v2711 = vadd.f32 %v2703, 0.2548296
        %v2712 = vadd.f32 %v2704, 0.2548296
        %v2713 = vadd.f32 %v2705, 0.2548296
        %v2714 = vmul.f32 %v2635, %v2706
        %v2715 = vmul.f32 %v2637, %v2707
        %v2716 = vmul.f32 %v2639, %v2708
        %v2717 = vmul.f32 %v2641, %v2709
        %v2718 = vmul.f32 %v2643, %v2710
        %v2719 = vmul.f32 %v2645, %v2711
        %v2720 = vmul.f32 %v2647, %v2712
        %v2721 = vmul.f32 %v2649, %v2713
        %v2722 = vmul.f32 %v2610, %v2610
        %v2723 = vmul.f32 %v2611, %v2611
        %v2724 = vmul.f32 %v2612, %v2612
        %v2725 = vmul.f32 %v2613, %v2613
        %v2726 = vmul.f32 %v2614, %v2614
        %v2727 = vmul.f32 %v2615, %v2615
        %v2728 = vmul.f32 %v2616, %v2616
        %v2729 = vmul.f32 %v2617, %v2617
        %v2730 = vsub.f32 0.0, %v2722
        %v2731 = vsub.f32 0.0, %v2723
        %v2732 = vsub.f32 0.0, %v2724
        %v2733 = vsub.f32 0.0, %v2725
        %v2734 = vsub.f32 0.0, %v2726
        %v2735 = vsub.f32 0.0, %v2727
        %v2736 = vsub.f32 0.0, %v2728
        %v2737 = vsub.f32 0.0, %v2729
        %v2738 = vmul.f32 %v2730, 1.442695
        %v2739 = vpow.pop %v2738
        %v2740 = vmul.f32 %v2731, 1.442695
        %v2741 = vpow.pop %v2740
        %v2742 = vmul.f32 %v2732, 1.442695
        %v2743 = vpow.pop %v2742
        %v2744 = vmul.f32 %v2733, 1.442695
        %v2745 = vpow.pop %v2744
        %v2746 = vmul.f32 %v2734, 1.442695
        %v2747 = vpow.pop %v2746
        %v2748 = vmul.f32 %v2735, 1.442695
        %v2749 = vpow.pop %v2748
        %v2750 = vmul.f32 %v2736, 1.442695
        %v2751 = vpow.pop %v2750
        %v2752 = vmul.f32 %v2737, 1.442695
        %v2753 = vpow.pop %v2752
        %v2754 = vmul.f32 %v2714, %v2739
        %v2755 = vmul.f32 %v2715, %v2741
        %v2756 = vmul.f32 %v2716, %v2743
        %v2757 = vmul.f32 %v2717, %v2745
        %v2758 = vmul.f32 %v2718, %v2747
        %v2759 = vmul.f32 %v2719, %v2749
        %v2760 = vmul.f32 %v2720, %v2751
        %v2761 = vmul.f32 %v2721, %v2753
        %v2762 = vsub.f32 1.0, %v2754
        %v2763 = vsub.f32 1.0, %v2755
        %v2764 = vsub.f32 1.0, %v2756
        %v2765 = vsub.f32 1.0, %v2757
        %v2766 = vsub.f32 1.0, %v2758
        %v2767 = vsub.f32 1.0, %v2759
        %v2768 = vsub.f32 1.0, %v2760
        %v2769 = vsub.f32 1.0, %v2761
        %vm2770 = vcmp.lt.f32.partialorder %v2602, 0.0
        %vm2771 = vcmp.lt.f32.partialorder %v2603, 0.0
        %vm2772 = vcmp.lt.f32.partialorder %v2604, 0.0
        %vm2773 = vcmp.lt.f32.partialorder %v2605, 0.0
        %vm2774 = vcmp.lt.f32.partialorder %v2606, 0.0
        %vm2775 = vcmp.lt.f32.partialorder %v2607, 0.0
        %vm2776 = vcmp.lt.f32.partialorder %v2608, 0.0
        %vm2777 = vcmp.lt.f32.partialorder %v2609, 0.0
        %v2778 = vsub.f32 0.0, %v2762
        %v2779 = vsub.f32 0.0, %v2763
        %v2780 = vsub.f32 0.0, %v2764
        %v2781 = vsub.f32 0.0, %v2765
        %v2782 = vsub.f32 0.0, %v2766
        %v2783 = vsub.f32 0.0, %v2767
        %v2784 = vsub.f32 0.0, %v2768
        %v2785 = vsub.f32 0.0, %v2769
        %v2786 = vsel %vm2770, %v2778, %v2762
        %v2787 = vsel %vm2771, %v2779, %v2763
        %v2788 = vsel %vm2772, %v2780, %v2764
        %v2789 = vsel %vm2773, %v2781, %v2765
        %v2790 = vsel %vm2774, %v2782, %v2766
        %v2791 = vsel %vm2775, %v2783, %v2767
        %v2792 = vsel %vm2776, %v2784, %v2768
        %v2793 = vsel %vm2777, %v2785, %v2769
        %v2794 = vmul.f32 %v2594, 0.5
        %v2795 = vmul.f32 %v2595, 0.5
        %v2796 = vmul.f32 %v2596, 0.5
        %v2797 = vmul.f32 %v2597, 0.5
        %v2798 = vmul.f32 %v2598, 0.5
        %v2799 = vmul.f32 %v2599, 0.5
        %v2800 = vmul.f32 %v2600, 0.5
        %v2801 = vmul.f32 %v2601, 0.5
        %v2802 = vadd.f32 %v2786, 1.0
        %v2803 = vadd.f32 %v2787, 1.0
        %v2804 = vadd.f32 %v2788, 1.0
        %v2805 = vadd.f32 %v2789, 1.0
        %v2806 = vadd.f32 %v2790, 1.0
        %v2807 = vadd.f32 %v2791, 1.0
        %v2808 = vadd.f32 %v2792, 1.0
        %v2809 = vadd.f32 %v2793, 1.0
        %v2810 = vmul.f32 %v2794, %v2802
        %v2811 = vmul.f32 %v2795, %v2803
        %v2812 = vmul.f32 %v2796, %v2804
        %v2813 = vmul.f32 %v2797, %v2805
        %v2814 = vmul.f32 %v2798, %v2806
        %v2815 = vmul.f32 %v2799, %v2807
        %v2816 = vmul.f32 %v2800, %v2808
        %v2817 = vmul.f32 %v2801, %v2809
        %2818 = vst [vmem:[%s203] sm:$0xff] %v2810
        %2819 = vst [vmem:[%s203 + $0x8] sm:$0xff] %v2811
        %2820 = vst [vmem:[%s203 + $0x10] sm:$0xff] %v2812
        %2821 = vst [vmem:[%s203 + $0x18] sm:$0xff] %v2813
        %2822 = vst [vmem:[%s203 + $0x20] sm:$0xff] %v2814
        %2823 = vst [vmem:[%s203 + $0x28] sm:$0xff] %v2815
        %2824 = vst [vmem:[%s203 + $0x30] sm:$0xff] %v2816
        %2825 = vst [vmem:[%s203 + $0x38] sm:$0xff] %v2817
        %s2826 = sand.u32 %s97, 1
        %s2827 = scalar_lea.sflag [#allocation5], %s2826
        %s2828 = sand.u32 %s97, 1
        %s2829 = smul.addr %s2828, 64
        %s2830 = scalar_lea.vmem [#allocation8], %s2829
        // Predicated region
        $region41: #{tpu_custom_call.1} parent=31 // pred_check
          %p2831 = pneg %p107
        $region42: #{tpu_custom_call.1} parent=31 // pred_check_branch
          %2833 = sbr.rel (%p2831) target = $region44
        $region43: #{tpu_custom_call.1} parent=31 // pred_region
          %s2835 = ssub.s32 1024, 1024
          %2836 = vsyncadd %s2827, %s2835
          %s2837 = smul.addr %s21, 8
          %s2838 = smul.addr %s2837, 128
          %s2839 = scalar_lea.hbm %s3, %s2838
          %s2840 = sshll.u32 %s2830, 4
          %s2841 = int_to_ptr.vmem [resolvable:$true] %s2840
          %2846 = dma.vmem_to_hbm [thread:$0]  %s2841, 1024, %s2839, %s2827, 512, 512, 32
        $region44: #{tpu_custom_call.1} parent=31 // pred_fallthru
          _
      $region32: #{tpu_custom_call.1} parent=5 // pred_fallthru
        _
      %p2847 = scmp.le.s32.totalorder 2, %s16
      // Predicated region
      $region45: #{tpu_custom_call.1} parent=5 // pred_check
        %p2848 = pneg %p2847
      $region46: #{tpu_custom_call.1} parent=5 // pred_check_branch
        %2850 = sbr.rel (%p2848) target = $region48
      $region47: #{tpu_custom_call.1} parent=5 // pred_region
        %s2851 = ssub.s32 %s16, 2
        // Predicated region
        $region49: #{tpu_custom_call.1} parent=47 // pred_check
          %p2852 = pneg %p113
        $region50: #{tpu_custom_call.1} parent=47 // pred_check_branch
          %2854 = sbr.rel (%p2852) target = $region52
        $region51: #{tpu_custom_call.1} parent=47 // pred_region
          %s2855 = sand.u32 %s98, 1
          %s2856 = scalar_lea.sflag [#allocation5], %s2855
          %s2857 = sand.u32 %s98, 1
          %s2858 = smul.addr %s2857, 64
          %s2859 = scalar_lea.vmem [#allocation8], %s2858
          %2860 = dma.done %s2856, 1024
        $region52: #{tpu_custom_call.1} parent=47 // pred_fallthru
          _
      $region48: #{tpu_custom_call.1} parent=5 // pred_fallthru
        _
    $region6: #{tpu_custom_call.1} parent=1 // loop_footer
      %s20 = sadd.s32 1, %s16
    $region7: #{tpu_custom_call.1} parent=1 // loop_footer_branch
      %15 = sbr.rel target = $region3
    $region8: #{tpu_custom_call.1} parent=1 // loop_exit
      _
    %2861 = vsyncpa [#allocation4], 1
    %s2862 = scalar_lea.sflag [#allocation4], 1
    %2863 = vsyncpa %s2862, 1
    %2864 = vsyncpa [#allocation7], 1
    %2865 = vsyncpa [#allocation5], 1
    %s2866 = scalar_lea.sflag [#allocation5], 1
    %2867 = vsyncpa %s2866, 1

</llo_original>
